<compile_context>
chip_gen: v6e
topology: v6e:2x2x1
jax: 0.10.0
libtpu: 0.0.40
codegen_flags: <defaults>
</compile_context>

<pallas_src>
import functools

import jax
import jax.numpy as jnp
from jax.experimental import pallas as pl
from jax.experimental.pallas import tpu as pltpu


LANES = 128  # TPU lane width


# ----------------------------- index helpers (static Python) -----------------------------
def _anisotropic_indices(n):
    """Row-major lower-triangular indices, matching torch.tril_indices(n, n)."""
    inds_a, inds_b = [], []
    for i in range(n):
        for j in range(i + 1):
            inds_a.append(i)
            inds_b.append(j)
    return tuple(inds_a), tuple(inds_b)


def _orthotropic_indices():
    return (0, 1, 1, 2, 2, 2, 3, 4, 5), (0, 0, 1, 0, 1, 2, 3, 4, 5)


def _positive_function(positive):
    if positive == 'Abs':
        return jnp.abs
    elif positive == 'Square':
        return jnp.square
    elif positive == 'Softplus':
        return jax.nn.softplus
    elif positive == 'ReLU':
        return jax.nn.relu
    elif positive == 'ReLU6':
        return lambda x: jnp.clip(x, 0.0, 6.0)
    elif positive == '4':
        return lambda x: jnp.power(x, 4)
    elif positive == 'Exp':
        return jnp.exp
    elif positive == 'None':
        return lambda x: x
    else:
        raise ValueError(f'Positive transformation {positive} not supported!')


def _pick_block_batch(requested):
    """Batch-tile cap (in elements).  16384 is safe on v7x (64 MiB VMEM/TC); bump to
    32768 when the chip reports the larger 128 MiB VMEM of v5e/v6e."""
    if requested is not None:
        return max(1024, (int(requested) // 1024) * 1024)
    cap = 16384
    try:
        vmem = pltpu.get_tpu_info().vmem_capacity_bytes
        if vmem >= 96 * (1 << 20):
            cap = 32768
    except Exception:
        pass
    return cap


# --------------------------------- Pallas kernel ---------------------------------
def _cholesky_spd_kernel(x_ref, o_ref, diag_ref, *,
                         positive, min_value, inds_a, inds_b, n_out):
    """Lane-batched Cholesky SPD construction.

    x_ref:    (n_tri, TBS, 128)        tril-vector rows, batch on (sublane, lane)
    o_ref:    (n_out*n_out, TBS, 128)  flattened SPD matrices, same batch layout
    diag_ref: (n_out, TBS, 128) f32    scratch for the transformed diagonal rows
    """
    pos_fn = _positive_function(positive)
    idx_of = {(a, b): r for r, (a, b) in enumerate(zip(inds_a, inds_b))}

    # 1) Diagonal rows: positive transform + min_value, written once to a small f32
    #    VMEM scratch so downstream reads are on-demand (bounds live ranges at large TBS).
    for d in range(n_out):
        r = idx_of.get((d, d))
        if r is not None:
            diag_ref[d] = pos_fn(x_ref[r].astype(jnp.float32)) + min_value
        else:
            diag_ref[d] = jnp.zeros(diag_ref.shape[1:], dtype=jnp.float32)

    def load(i, j):
        """L[i, j] as a (TBS, 128) f32 slab, or None if the entry is not present."""
        if i == j:
            return diag_ref[i]
        r = idx_of.get((i, j))
        if r is None:
            return None
        return x_ref[r].astype(jnp.float32)

    zeros = jnp.zeros(o_ref.shape[1:], dtype=jnp.float32)

    # 2) out[i, k] = sum_{j <= min(i,k)} L[i, j] * L[k, j]  (fully unrolled VPU FMAs).
    #    Only the upper half (k >= i) is computed; the mirror is a second store of the
    #    same slab (result is symmetric) -- do NOT recompute or drop it.
    for i in range(n_out):
        for k in range(i, n_out):
            acc = None
            for j in range(min(i, k) + 1):
                a = load(i, j)
                b = load(k, j)
                if a is None or b is None:
                    continue  # entry not present (orthotropic) -> contributes 0
                t = a * b
                acc = t if acc is None else acc + t
            if acc is None:
                acc = zeros
            val = acc.astype(o_ref.dtype)
            # Each store is one aligned (TBS, 128) slab -> full-lane, unmasked stores.
            o_ref[i * n_out + k] = val
            if k != i:
                o_ref[k * n_out + i] = val


# ----------------------------------- wrapper --------------------------------------
@functools.partial(jax.jit, static_argnames=(
    'output_shape', 'symmetry', 'positive', 'min_value', 'block_batch'))
def cholesky_forward(x,
                     output_shape=6,
                     symmetry='anisotropic',
                     positive='None',
                     min_value=1e-8,
                     block_batch=None):
    if symmetry == 'anisotropic':
        inds_a, inds_b = _anisotropic_indices(output_shape)
    elif symmetry == 'orthotropic':
        if output_shape != 6:
            raise ValueError('symmetry=orthotropic can only be used with output_shape=6')
        inds_a, inds_b = _orthotropic_indices()
    else:
        raise ValueError(f'Symmetry {symmetry} not supported!')

    B, n_tri = x.shape
    if n_tri != len(inds_a):
        raise ValueError(f'expected input_shape={len(inds_a)}, got {n_tri}')
    N = output_shape
    itemsize = jnp.dtype(x.dtype).itemsize

    # Sublane granularity: 8 for 32-bit dtypes, 16 for packed 16-bit dtypes (bf16).
    min_tbs = 8 if itemsize >= 4 else 16
    pad_mult = min_tbs * LANES

    # Pad batch only to the sublane*lane granule (NOT a full tile) -- padding waste is
    # at most ~1K elements instead of a full 16K/32K tile.
    B_pad = ((B + pad_mult - 1) // pad_mult) * pad_mult
    S = B_pad // LANES  # sublane-blocks of 128 batch elements

    # Tile selection: as large as the VMEM budget allows, but split into >= 2 tiles when
    # possible so v7x's 2 TensorCores both get work (grid axis is "parallel").
    TBS_cap = max(min_tbs, _pick_block_batch(block_batch) // LANES)
    min_tiles = 2 if S > min_tbs else 1
    tbs = -(-S // min_tiles)                      # cdiv
    tbs = -(-tbs // min_tbs) * min_tbs            # round up to sublane granule
    TBS = max(min_tbs, min(TBS_cap, tbs))
    num_tiles = -(-S // TBS)                      # last block may be partial

    # Lane-dense layout: batch on the last axis, reshaped to (sublane, lane) slabs.
    # TODO(synk): in a real model keep this (n_tri, B)/(N*N, B) layout end-to-end (or
    # fuse the transposes into the neighbors) to avoid the extra HBM round trips.
    xt = jnp.transpose(x, (1, 0))                                   # (n_tri, B)
    if B_pad != B:
        xt = jnp.pad(xt, ((0, 0), (0, B_pad - B)))
    xt = xt.reshape(n_tri, S, LANES)                                 # (n_tri, S, 128)

    kernel = functools.partial(
        _cholesky_spd_kernel,
        positive=positive,
        min_value=float(min_value),
        inds_a=inds_a,
        inds_b=inds_b,
        n_out=N,
    )

    # VMEM budget: double-buffered in+out blocks + diag scratch + compute headroom.
    block_in = n_tri * TBS * LANES * itemsize
    block_out = N * N * TBS * LANES * itemsize
    scratch_b = N * TBS * LANES * 4
    vmem_need = 2 * (block_in + block_out) + scratch_b + (8 << 20)
    vmem_limit = int(min(max(vmem_need, 32 << 20), 64 << 20))

    # Cost estimate: the op is HBM-bandwidth-bound; help XLA schedule neighbors.
    idx_of = {(a, b): r for r, (a, b) in enumerate(zip(inds_a, inds_b))}
    n_terms = 0
    for i in range(N):
        for k in range(i, N):
            for j in range(min(i, k) + 1):
                if (i, j) in idx_of and (k, j) in idx_of:
                    n_terms += 1
    cost = pl.CostEstimate(
        flops=(2 * n_terms + 2 * N) * B_pad,
        transcendentals=(N * B_pad) if positive in ('Softplus', 'Exp') else 0,
        bytes_accessed=(n_tri + N * N) * itemsize * B_pad,
    )

    out = pl.pallas_call(
        kernel,
        out_shape=jax.ShapeDtypeStruct((N * N, S, LANES), x.dtype),
        grid=(num_tiles,),
        in_specs=[pl.BlockSpec((n_tri, TBS, LANES), lambda b: (0, b, 0))],
        out_specs=pl.BlockSpec((N * N, TBS, LANES), lambda b: (0, b, 0)),
        scratch_shapes=[pltpu.VMEM((N, TBS, LANES), jnp.float32)],
        compiler_params=pltpu.CompilerParams(
            dimension_semantics=("parallel",),
            vmem_limit_bytes=vmem_limit),
        cost_estimate=cost,
    )(xt)

    # Back to the PyTorch layout: (N*N, B_pad) -> (B, N, N).
    out = out.reshape(N * N, B_pad)[:, :B]
    out = jnp.transpose(out, (1, 0)).reshape(B, N, N)
    return out


# -------------------------------- reference (JAX) ---------------------------------
def cholesky_reference(x, output_shape=6, symmetry='anisotropic',
                       positive='None', min_value=1e-8):
    if symmetry == 'anisotropic':
        inds_a, inds_b = _anisotropic_indices(output_shape)
    else:
        inds_a, inds_b = _orthotropic_indices()
    ia = jnp.array(inds_a, dtype=jnp.int32)
    ib = jnp.array(inds_b, dtype=jnp.int32)
    pos_fn = _positive_function(positive)
    is_diag = ia == ib
    xt = jnp.where(is_diag[None, :], pos_fn(x) + min_value, x)
    L = jnp.zeros((x.shape[0], output_shape, output_shape), dtype=x.dtype)
    L = L.at[:, ia, ib].set(xt)
    return jnp.einsum('bij,bkj->bik', L, L)


if __name__ == "__main__":
    key = jax.random.PRNGKey(0)
    N = 6
    n_tri = N * (N + 1) // 2  # 21
    k1, k2, k3 = jax.random.split(key, 3)

    # Test 1: small batch (single tile), anisotropic, identity positive transform.
    B = 8
    x1 = jax.random.normal(k1, (B, n_tri), dtype=jnp.float32)
    out1 = jax.block_until_ready(cholesky_forward(x1, output_shape=N))
    ref1 = cholesky_reference(x1, output_shape=N)
    assert out1.shape == (B, N, N)
    assert jnp.allclose(out1, ref1, atol=1e-5, rtol=1e-5), "mismatch (anisotropic/None)"

    # Test 2: batch padded only to 1024-granule, >=2 grid tiles with a partial last
    # block, Softplus diagonal transform.
    B2 = 2100
    x2 = jax.random.normal(k2, (B2, n_tri), dtype=jnp.float32)
    out2 = jax.block_until_ready(
        cholesky_forward(x2, output_shape=N, positive='Softplus'))
    ref2 = cholesky_reference(x2, output_shape=N, positive='Softplus')
    assert out2.shape == (B2, N, N)
    assert jnp.allclose(out2, ref2, atol=1e-5, rtol=1e-5), "mismatch (anisotropic/Softplus)"

    # Test 3: orthotropic symmetry with Abs positive transform.
    x3 = jax.random.normal(k3, (B, 9), dtype=jnp.float32)
    out3 = jax.block_until_ready(
        cholesky_forward(x3, output_shape=6, symmetry='orthotropic', positive='Abs'))
    ref3 = cholesky_reference(x3, output_shape=6, symmetry='orthotropic', positive='Abs')
    assert out3.shape == (B, 6, 6)
    assert jnp.allclose(out3, ref3, atol=1e-5, rtol=1e-5), "mismatch (orthotropic/Abs)"

    print("KERNEL_OK")
</pallas_src>

<mosaic_0001>
module attributes {stable_mosaic.version = 11 : i64} {
  func.func @_cholesky_spd_kernel(%arg0: i32, %arg1: memref<21x8x128xf32, #tpu.memory_space<vmem>>, %arg2: memref<36x8x128xf32, #tpu.memory_space<vmem>>, %arg3: memref<6x8x128xf32, #tpu.memory_space<vmem>>) attributes {dimension_semantics = [#tpu.dimension_semantics<parallel>], iteration_bounds = array<i64: 1>, scalar_prefetch = 0 : i64, scratch_operands = 1 : i64, tpu.core_type = #tpu.core_type<tc>, window_params = [{transform_indices = @transform_0, window_bounds = array<i64: 21, 8, 128>}, {transform_indices = @transform_1, window_bounds = array<i64: 36, 8, 128>}]} {
    %c0 = arith.constant 0 : index
    %c0_0 = arith.constant 0 : index
    %c0_1 = arith.constant 0 : index
    %0 = vector.load %arg1[%c0, %c0_0, %c0_1] : memref<21x8x128xf32, #tpu.memory_space<vmem>>, vector<1x8x128xf32>
    %1 = vector.shape_cast %0 : vector<1x8x128xf32> to vector<8x128xf32>
    %cst = arith.constant 9.99999993E-9 : f32
    %2 = vector.broadcast %cst : f32 to vector<8x128xf32>
    %3 = arith.addf %1, %2 : vector<8x128xf32>
    %c0_2 = arith.constant 0 : index
    %c0_3 = arith.constant 0 : index
    %c0_4 = arith.constant 0 : index
    %4 = vector.load %arg3[%c0_2, %c0_3, %c0_4] : memref<6x8x128xf32, #tpu.memory_space<vmem>>, vector<1x8x128xf32>
    %5 = vector.shape_cast %4 : vector<1x8x128xf32> to vector<8x128xf32>
    %6 = vector.shape_cast %3 : vector<8x128xf32> to vector<1x8x128xf32>
    tpu.vector_store %arg3[%c0_2, %c0_3, %c0_4], %6 {strides = array<i32>} : memref<6x8x128xf32, #tpu.memory_space<vmem>>, vector<1x8x128xf32>,
    %c2 = arith.constant 2 : index
    %c0_5 = arith.constant 0 : index
    %c0_6 = arith.constant 0 : index
    %7 = vector.load %arg1[%c2, %c0_5, %c0_6] : memref<21x8x128xf32, #tpu.memory_space<vmem>>, vector<1x8x128xf32>
    %8 = vector.shape_cast %7 : vector<1x8x128xf32> to vector<8x128xf32>
    %cst_7 = arith.constant 9.99999993E-9 : f32
    %9 = vector.broadcast %cst_7 : f32 to vector<8x128xf32>
    %10 = arith.addf %8, %9 : vector<8x128xf32>
    %c1 = arith.constant 1 : index
    %c0_8 = arith.constant 0 : index
    %c0_9 = arith.constant 0 : index
    %11 = vector.load %arg3[%c1, %c0_8, %c0_9] : memref<6x8x128xf32, #tpu.memory_space<vmem>>, vector<1x8x128xf32>
    %12 = vector.shape_cast %11 : vector<1x8x128xf32> to vector<8x128xf32>
    %13 = vector.shape_cast %10 : vector<8x128xf32> to vector<1x8x128xf32>
    tpu.vector_store %arg3[%c1, %c0_8, %c0_9], %13 {strides = array<i32>} : memref<6x8x128xf32, #tpu.memory_space<vmem>>, vector<1x8x128xf32>,
    %c5 = arith.constant 5 : index
    %c0_10 = arith.constant 0 : index
    %c0_11 = arith.constant 0 : index
    %14 = vector.load %arg1[%c5, %c0_10, %c0_11] : memref<21x8x128xf32, #tpu.memory_space<vmem>>, vector<1x8x128xf32>
    %15 = vector.shape_cast %14 : vector<1x8x128xf32> to vector<8x128xf32>
    %cst_12 = arith.constant 9.99999993E-9 : f32
    %16 = vector.broadcast %cst_12 : f32 to vector<8x128xf32>
    %17 = arith.addf %15, %16 : vector<8x128xf32>
    %c2_13 = arith.constant 2 : index
    %c0_14 = arith.constant 0 : index
    %c0_15 = arith.constant 0 : index
    %18 = vector.load %arg3[%c2_13, %c0_14, %c0_15] : memref<6x8x128xf32, #tpu.memory_space<vmem>>, vector<1x8x128xf32>
    %19 = vector.shape_cast %18 : vector<1x8x128xf32> to vector<8x128xf32>
    %20 = vector.shape_cast %17 : vector<8x128xf32> to vector<1x8x128xf32>
    tpu.vector_store %arg3[%c2_13, %c0_14, %c0_15], %20 {strides = array<i32>} : memref<6x8x128xf32, #tpu.memory_space<vmem>>, vector<1x8x128xf32>,
    %c9 = arith.constant 9 : index
    %c0_16 = arith.constant 0 : index
    %c0_17 = arith.constant 0 : index
    %21 = vector.load %arg1[%c9, %c0_16, %c0_17] : memref<21x8x128xf32, #tpu.memory_space<vmem>>, vector<1x8x128xf32>
    %22 = vector.shape_cast %21 : vector<1x8x128xf32> to vector<8x128xf32>
    %cst_18 = arith.constant 9.99999993E-9 : f32
    %23 = vector.broadcast %cst_18 : f32 to vector<8x128xf32>
    %24 = arith.addf %22, %23 : vector<8x128xf32>
    %c3 = arith.constant 3 : index
    %c0_19 = arith.constant 0 : index
    %c0_20 = arith.constant 0 : index
    %25 = vector.load %arg3[%c3, %c0_19, %c0_20] : memref<6x8x128xf32, #tpu.memory_space<vmem>>, vector<1x8x128xf32>
    %26 = vector.shape_cast %25 : vector<1x8x128xf32> to vector<8x128xf32>
    %27 = vector.shape_cast %24 : vector<8x128xf32> to vector<1x8x128xf32>
    tpu.vector_store %arg3[%c3, %c0_19, %c0_20], %27 {strides = array<i32>} : memref<6x8x128xf32, #tpu.memory_space<vmem>>, vector<1x8x128xf32>,
    %c14 = arith.constant 14 : index
    %c0_21 = arith.constant 0 : index
    %c0_22 = arith.constant 0 : index
    %28 = vector.load %arg1[%c14, %c0_21, %c0_22] : memref<21x8x128xf32, #tpu.memory_space<vmem>>, vector<1x8x128xf32>
    %29 = vector.shape_cast %28 : vector<1x8x128xf32> to vector<8x128xf32>
    %cst_23 = arith.constant 9.99999993E-9 : f32
    %30 = vector.broadcast %cst_23 : f32 to vector<8x128xf32>
    %31 = arith.addf %29, %30 : vector<8x128xf32>
    %c4 = arith.constant 4 : index
    %c0_24 = arith.constant 0 : index
    %c0_25 = arith.constant 0 : index
    %32 = vector.load %arg3[%c4, %c0_24, %c0_25] : memref<6x8x128xf32, #tpu.memory_space<vmem>>, vector<1x8x128xf32>
    %33 = vector.shape_cast %32 : vector<1x8x128xf32> to vector<8x128xf32>
    %34 = vector.shape_cast %31 : vector<8x128xf32> to vector<1x8x128xf32>
    tpu.vector_store %arg3[%c4, %c0_24, %c0_25], %34 {strides = array<i32>} : memref<6x8x128xf32, #tpu.memory_space<vmem>>, vector<1x8x128xf32>,
    %c20 = arith.constant 20 : index
    %c0_26 = arith.constant 0 : index
    %c0_27 = arith.constant 0 : index
    %35 = vector.load %arg1[%c20, %c0_26, %c0_27] : memref<21x8x128xf32, #tpu.memory_space<vmem>>, vector<1x8x128xf32>
    %36 = vector.shape_cast %35 : vector<1x8x128xf32> to vector<8x128xf32>
    %cst_28 = arith.constant 9.99999993E-9 : f32
    %37 = vector.broadcast %cst_28 : f32 to vector<8x128xf32>
    %38 = arith.addf %36, %37 : vector<8x128xf32>
    %c5_29 = arith.constant 5 : index
    %c0_30 = arith.constant 0 : index
    %c0_31 = arith.constant 0 : index
    %39 = vector.load %arg3[%c5_29, %c0_30, %c0_31] : memref<6x8x128xf32, #tpu.memory_space<vmem>>, vector<1x8x128xf32>
    %40 = vector.shape_cast %39 : vector<1x8x128xf32> to vector<8x128xf32>
    %41 = vector.shape_cast %38 : vector<8x128xf32> to vector<1x8x128xf32>
    tpu.vector_store %arg3[%c5_29, %c0_30, %c0_31], %41 {strides = array<i32>} : memref<6x8x128xf32, #tpu.memory_space<vmem>>, vector<1x8x128xf32>,
    %c0_32 = arith.constant 0 : index
    %c0_33 = arith.constant 0 : index
    %c0_34 = arith.constant 0 : index
    %42 = vector.load %arg3[%c0_32, %c0_33, %c0_34] : memref<6x8x128xf32, #tpu.memory_space<vmem>>, vector<1x8x128xf32>
    %43 = vector.shape_cast %42 : vector<1x8x128xf32> to vector<8x128xf32>
    %c0_35 = arith.constant 0 : index
    %c0_36 = arith.constant 0 : index
    %c0_37 = arith.constant 0 : index
    %44 = vector.load %arg3[%c0_35, %c0_36, %c0_37] : memref<6x8x128xf32, #tpu.memory_space<vmem>>, vector<1x8x128xf32>
    %45 = vector.shape_cast %44 : vector<1x8x128xf32> to vector<8x128xf32>
    %46 = arith.mulf %43, %45 : vector<8x128xf32>
    %c0_38 = arith.constant 0 : index
    %c0_39 = arith.constant 0 : index
    %c0_40 = arith.constant 0 : index
    %47 = vector.load %arg2[%c0_38, %c0_39, %c0_40] : memref<36x8x128xf32, #tpu.memory_space<vmem>>, vector<1x8x128xf32>
    %48 = vector.shape_cast %47 : vector<1x8x128xf32> to vector<8x128xf32>
    %49 = vector.shape_cast %46 : vector<8x128xf32> to vector<1x8x128xf32>
    tpu.vector_store %arg2[%c0_38, %c0_39, %c0_40], %49 {strides = array<i32>} : memref<36x8x128xf32, #tpu.memory_space<vmem>>, vector<1x8x128xf32>,
    %c0_41 = arith.constant 0 : index
    %c0_42 = arith.constant 0 : index
    %c0_43 = arith.constant 0 : index
    %50 = vector.load %arg3[%c0_41, %c0_42, %c0_43] : memref<6x8x128xf32, #tpu.memory_space<vmem>>, vector<1x8x128xf32>
    %51 = vector.shape_cast %50 : vector<1x8x128xf32> to vector<8x128xf32>
    %c1_44 = arith.constant 1 : index
    %c0_45 = arith.constant 0 : index
    %c0_46 = arith.constant 0 : index
    %52 = vector.load %arg1[%c1_44, %c0_45, %c0_46] : memref<21x8x128xf32, #tpu.memory_space<vmem>>, vector<1x8x128xf32>
    %53 = vector.shape_cast %52 : vector<1x8x128xf32> to vector<8x128xf32>
    %54 = arith.mulf %51, %53 : vector<8x128xf32>
    %c1_47 = arith.constant 1 : index
    %c0_48 = arith.constant 0 : index
    %c0_49 = arith.constant 0 : index
    %55 = vector.load %arg2[%c1_47, %c0_48, %c0_49] : memref<36x8x128xf32, #tpu.memory_space<vmem>>, vector<1x8x128xf32>
    %56 = vector.shape_cast %55 : vector<1x8x128xf32> to vector<8x128xf32>
    %57 = vector.shape_cast %54 : vector<8x128xf32> to vector<1x8x128xf32>
    tpu.vector_store %arg2[%c1_47, %c0_48, %c0_49], %57 {strides = array<i32>} : memref<36x8x128xf32, #tpu.memory_space<vmem>>, vector<1x8x128xf32>,
    %c6 = arith.constant 6 : index
    %c0_50 = arith.constant 0 : index
    %c0_51 = arith.constant 0 : index
    %58 = vector.load %arg2[%c6, %c0_50, %c0_51] : memref<36x8x128xf32, #tpu.memory_space<vmem>>, vector<1x8x128xf32>
    %59 = vector.shape_cast %58 : vector<1x8x128xf32> to vector<8x128xf32>
    %60 = vector.shape_cast %54 : vector<8x128xf32> to vector<1x8x128xf32>
    tpu.vector_store %arg2[%c6, %c0_50, %c0_51], %60 {strides = array<i32>} : memref<36x8x128xf32, #tpu.memory_space<vmem>>, vector<1x8x128xf32>,
    %c0_52 = arith.constant 0 : index
    %c0_53 = arith.constant 0 : index
    %c0_54 = arith.constant 0 : index
    %61 = vector.load %arg3[%c0_52, %c0_53, %c0_54] : memref<6x8x128xf32, #tpu.memory_space<vmem>>, vector<1x8x128xf32>
    %62 = vector.shape_cast %61 : vector<1x8x128xf32> to vector<8x128xf32>
    %c3_55 = arith.constant 3 : index
    %c0_56 = arith.constant 0 : index
    %c0_57 = arith.constant 0 : index
    %63 = vector.load %arg1[%c3_55, %c0_56, %c0_57] : memref<21x8x128xf32, #tpu.memory_space<vmem>>, vector<1x8x128xf32>
    %64 = vector.shape_cast %63 : vector<1x8x128xf32> to vector<8x128xf32>
    %65 = arith.mulf %62, %64 : vector<8x128xf32>
    %c2_58 = arith.constant 2 : index
    %c0_59 = arith.constant 0 : index
    %c0_60 = arith.constant 0 : index
    %66 = vector.load %arg2[%c2_58, %c0_59, %c0_60] : memref<36x8x128xf32, #tpu.memory_space<vmem>>, vector<1x8x128xf32>
    %67 = vector.shape_cast %66 : vector<1x8x128xf32> to vector<8x128xf32>
    %68 = vector.shape_cast %65 : vector<8x128xf32> to vector<1x8x128xf32>
    tpu.vector_store %arg2[%c2_58, %c0_59, %c0_60], %68 {strides = array<i32>} : memref<36x8x128xf32, #tpu.memory_space<vmem>>, vector<1x8x128xf32>,
    %c12 = arith.constant 12 : index
    %c0_61 = arith.constant 0 : index
    %c0_62 = arith.constant 0 : index
    %69 = vector.load %arg2[%c12, %c0_61, %c0_62] : memref<36x8x128xf32, #tpu.memory_space<vmem>>, vector<1x8x128xf32>
    %70 = vector.shape_cast %69 : vector<1x8x128xf32> to vector<8x128xf32>
    %71 = vector.shape_cast %65 : vector<8x128xf32> to vector<1x8x128xf32>
    tpu.vector_store %arg2[%c12, %c0_61, %c0_62], %71 {strides = array<i32>} : memref<36x8x128xf32, #tpu.memory_space<vmem>>, vector<1x8x128xf32>,
    %c0_63 = arith.constant 0 : index
    %c0_64 = arith.constant 0 : index
    %c0_65 = arith.constant 0 : index
    %72 = vector.load %arg3[%c0_63, %c0_64, %c0_65] : memref<6x8x128xf32, #tpu.memory_space<vmem>>, vector<1x8x128xf32>
    %73 = vector.shape_cast %72 : vector<1x8x128xf32> to vector<8x128xf32>
    %c6_66 = arith.constant 6 : index
    %c0_67 = arith.constant 0 : index
    %c0_68 = arith.constant 0 : index
    %74 = vector.load %arg1[%c6_66, %c0_67, %c0_68] : memref<21x8x128xf32, #tpu.memory_space<vmem>>, vector<1x8x128xf32>
    %75 = vector.shape_cast %74 : vector<1x8x128xf32> to vector<8x128xf32>
    %76 = arith.mulf %73, %75 : vector<8x128xf32>
    %c3_69 = arith.constant 3 : index
    %c0_70 = arith.constant 0 : index
    %c0_71 = arith.constant 0 : index
    %77 = vector.load %arg2[%c3_69, %c0_70, %c0_71] : memref<36x8x128xf32, #tpu.memory_space<vmem>>, vector<1x8x128xf32>
    %78 = vector.shape_cast %77 : vector<1x8x128xf32> to vector<8x128xf32>
    %79 = vector.shape_cast %76 : vector<8x128xf32> to vector<1x8x128xf32>
    tpu.vector_store %arg2[%c3_69, %c0_70, %c0_71], %79 {strides = array<i32>} : memref<36x8x128xf32, #tpu.memory_space<vmem>>, vector<1x8x128xf32>,
    %c18 = arith.constant 18 : index
    %c0_72 = arith.constant 0 : index
    %c0_73 = arith.constant 0 : index
    %80 = vector.load %arg2[%c18, %c0_72, %c0_73] : memref<36x8x128xf32, #tpu.memory_space<vmem>>, vector<1x8x128xf32>
    %81 = vector.shape_cast %80 : vector<1x8x128xf32> to vector<8x128xf32>
    %82 = vector.shape_cast %76 : vector<8x128xf32> to vector<1x8x128xf32>
    tpu.vector_store %arg2[%c18, %c0_72, %c0_73], %82 {strides = array<i32>} : memref<36x8x128xf32, #tpu.memory_space<vmem>>, vector<1x8x128xf32>,
    %c0_74 = arith.constant 0 : index
    %c0_75 = arith.constant 0 : index
    %c0_76 = arith.constant 0 : index
    %83 = vector.load %arg3[%c0_74, %c0_75, %c0_76] : memref<6x8x128xf32, #tpu.memory_space<vmem>>, vector<1x8x128xf32>
    %84 = vector.shape_cast %83 : vector<1x8x128xf32> to vector<8x128xf32>
    %c10 = arith.constant 10 : index
    %c0_77 = arith.constant 0 : index
    %c0_78 = arith.constant 0 : index
    %85 = vector.load %arg1[%c10, %c0_77, %c0_78] : memref<21x8x128xf32, #tpu.memory_space<vmem>>, vector<1x8x128xf32>
    %86 = vector.shape_cast %85 : vector<1x8x128xf32> to vector<8x128xf32>
    %87 = arith.mulf %84, %86 : vector<8x128xf32>
    %c4_79 = arith.constant 4 : index
    %c0_80 = arith.constant 0 : index
    %c0_81 = arith.constant 0 : index
    %88 = vector.load %arg2[%c4_79, %c0_80, %c0_81] : memref<36x8x128xf32, #tpu.memory_space<vmem>>, vector<1x8x128xf32>
    %89 = vector.shape_cast %88 : vector<1x8x128xf32> to vector<8x128xf32>
    %90 = vector.shape_cast %87 : vector<8x128xf32> to vector<1x8x128xf32>
    tpu.vector_store %arg2[%c4_79, %c0_80, %c0_81], %90 {strides = array<i32>} : memref<36x8x128xf32, #tpu.memory_space<vmem>>, vector<1x8x128xf32>,
    %c24 = arith.constant 24 : index
    %c0_82 = arith.constant 0 : index
    %c0_83 = arith.constant 0 : index
    %91 = vector.load %arg2[%c24, %c0_82, %c0_83] : memref<36x8x128xf32, #tpu.memory_space<vmem>>, vector<1x8x128xf32>
    %92 = vector.shape_cast %91 : vector<1x8x128xf32> to vector<8x128xf32>
    %93 = vector.shape_cast %87 : vector<8x128xf32> to vector<1x8x128xf32>
    tpu.vector_store %arg2[%c24, %c0_82, %c0_83], %93 {strides = array<i32>} : memref<36x8x128xf32, #tpu.memory_space<vmem>>, vector<1x8x128xf32>,
    %c0_84 = arith.constant 0 : index
    %c0_85 = arith.constant 0 : index
    %c0_86 = arith.constant 0 : index
    %94 = vector.load %arg3[%c0_84, %c0_85, %c0_86] : memref<6x8x128xf32, #tpu.memory_space<vmem>>, vector<1x8x128xf32>
    %95 = vector.shape_cast %94 : vector<1x8x128xf32> to vector<8x128xf32>
    %c15 = arith.constant 15 : index
    %c0_87 = arith.constant 0 : index
    %c0_88 = arith.constant 0 : index
    %96 = vector.load %arg1[%c15, %c0_87, %c0_88] : memref<21x8x128xf32, #tpu.memory_space<vmem>>, vector<1x8x128xf32>
    %97 = vector.shape_cast %96 : vector<1x8x128xf32> to vector<8x128xf32>
    %98 = arith.mulf %95, %97 : vector<8x128xf32>
    %c5_89 = arith.constant 5 : index
    %c0_90 = arith.constant 0 : index
    %c0_91 = arith.constant 0 : index
    %99 = vector.load %arg2[%c5_89, %c0_90, %c0_91] : memref<36x8x128xf32, #tpu.memory_space<vmem>>, vector<1x8x128xf32>
    %100 = vector.shape_cast %99 : vector<1x8x128xf32> to vector<8x128xf32>
    %101 = vector.shape_cast %98 : vector<8x128xf32> to vector<1x8x128xf32>
    tpu.vector_store %arg2[%c5_89, %c0_90, %c0_91], %101 {strides = array<i32>} : memref<36x8x128xf32, #tpu.memory_space<vmem>>, vector<1x8x128xf32>,
    %c30 = arith.constant 30 : index
    %c0_92 = arith.constant 0 : index
    %c0_93 = arith.constant 0 : index
    %102 = vector.load %arg2[%c30, %c0_92, %c0_93] : memref<36x8x128xf32, #tpu.memory_space<vmem>>, vector<1x8x128xf32>
    %103 = vector.shape_cast %102 : vector<1x8x128xf32> to vector<8x128xf32>
    %104 = vector.shape_cast %98 : vector<8x128xf32> to vector<1x8x128xf32>
    tpu.vector_store %arg2[%c30, %c0_92, %c0_93], %104 {strides = array<i32>} : memref<36x8x128xf32, #tpu.memory_space<vmem>>, vector<1x8x128xf32>,
    %c1_94 = arith.constant 1 : index
    %c0_95 = arith.constant 0 : index
    %c0_96 = arith.constant 0 : index
    %105 = vector.load %arg1[%c1_94, %c0_95, %c0_96] : memref<21x8x128xf32, #tpu.memory_space<vmem>>, vector<1x8x128xf32>
    %106 = vector.shape_cast %105 : vector<1x8x128xf32> to vector<8x128xf32>
    %c1_97 = arith.constant 1 : index
    %c0_98 = arith.constant 0 : index
    %c0_99 = arith.constant 0 : index
    %107 = vector.load %arg1[%c1_97, %c0_98, %c0_99] : memref<21x8x128xf32, #tpu.memory_space<vmem>>, vector<1x8x128xf32>
    %108 = vector.shape_cast %107 : vector<1x8x128xf32> to vector<8x128xf32>
    %109 = arith.mulf %106, %108 : vector<8x128xf32>
    %c1_100 = arith.constant 1 : index
    %c0_101 = arith.constant 0 : index
    %c0_102 = arith.constant 0 : index
    %110 = vector.load %arg3[%c1_100, %c0_101, %c0_102] : memref<6x8x128xf32, #tpu.memory_space<vmem>>, vector<1x8x128xf32>
    %111 = vector.shape_cast %110 : vector<1x8x128xf32> to vector<8x128xf32>
    %c1_103 = arith.constant 1 : index
    %c0_104 = arith.constant 0 : index
    %c0_105 = arith.constant 0 : index
    %112 = vector.load %arg3[%c1_103, %c0_104, %c0_105] : memref<6x8x128xf32, #tpu.memory_space<vmem>>, vector<1x8x128xf32>
    %113 = vector.shape_cast %112 : vector<1x8x128xf32> to vector<8x128xf32>
    %114 = arith.mulf %111, %113 : vector<8x128xf32>
    %115 = arith.addf %109, %114 : vector<8x128xf32>
    %c7 = arith.constant 7 : index
    %c0_106 = arith.constant 0 : index
    %c0_107 = arith.constant 0 : index
    %116 = vector.load %arg2[%c7, %c0_106, %c0_107] : memref<36x8x128xf32, #tpu.memory_space<vmem>>, vector<1x8x128xf32>
    %117 = vector.shape_cast %116 : vector<1x8x128xf32> to vector<8x128xf32>
    %118 = vector.shape_cast %115 : vector<8x128xf32> to vector<1x8x128xf32>
    tpu.vector_store %arg2[%c7, %c0_106, %c0_107], %118 {strides = array<i32>} : memref<36x8x128xf32, #tpu.memory_space<vmem>>, vector<1x8x128xf32>,
    %c1_108 = arith.constant 1 : index
    %c0_109 = arith.constant 0 : index
    %c0_110 = arith.constant 0 : index
    %119 = vector.load %arg1[%c1_108, %c0_109, %c0_110] : memref<21x8x128xf32, #tpu.memory_space<vmem>>, vector<1x8x128xf32>
    %120 = vector.shape_cast %119 : vector<1x8x128xf32> to vector<8x128xf32>
    %c3_111 = arith.constant 3 : index
    %c0_112 = arith.constant 0 : index
    %c0_113 = arith.constant 0 : index
    %121 = vector.load %arg1[%c3_111, %c0_112, %c0_113] : memref<21x8x128xf32, #tpu.memory_space<vmem>>, vector<1x8x128xf32>
    %122 = vector.shape_cast %121 : vector<1x8x128xf32> to vector<8x128xf32>
    %123 = arith.mulf %120, %122 : vector<8x128xf32>
    %c1_114 = arith.constant 1 : index
    %c0_115 = arith.constant 0 : index
    %c0_116 = arith.constant 0 : index
    %124 = vector.load %arg3[%c1_114, %c0_115, %c0_116] : memref<6x8x128xf32, #tpu.memory_space<vmem>>, vector<1x8x128xf32>
    %125 = vector.shape_cast %124 : vector<1x8x128xf32> to vector<8x128xf32>
    %c4_117 = arith.constant 4 : index
    %c0_118 = arith.constant 0 : index
    %c0_119 = arith.constant 0 : index
    %126 = vector.load %arg1[%c4_117, %c0_118, %c0_119] : memref<21x8x128xf32, #tpu.memory_space<vmem>>, vector<1x8x128xf32>
    %127 = vector.shape_cast %126 : vector<1x8x128xf32> to vector<8x128xf32>
    %128 = arith.mulf %125, %127 : vector<8x128xf32>
    %129 = arith.addf %123, %128 : vector<8x128xf32>
    %c8 = arith.constant 8 : index
    %c0_120 = arith.constant 0 : index
    %c0_121 = arith.constant 0 : index
    %130 = vector.load %arg2[%c8, %c0_120, %c0_121] : memref<36x8x128xf32, #tpu.memory_space<vmem>>, vector<1x8x128xf32>
    %131 = vector.shape_cast %130 : vector<1x8x128xf32> to vector<8x128xf32>
    %132 = vector.shape_cast %129 : vector<8x128xf32> to vector<1x8x128xf32>
    tpu.vector_store %arg2[%c8, %c0_120, %c0_121], %132 {strides = array<i32>} : memref<36x8x128xf32, #tpu.memory_space<vmem>>, vector<1x8x128xf32>,
    %c13 = arith.constant 13 : index
    %c0_122 = arith.constant 0 : index
    %c0_123 = arith.constant 0 : index
    %133 = vector.load %arg2[%c13, %c0_122, %c0_123] : memref<36x8x128xf32, #tpu.memory_space<vmem>>, vector<1x8x128xf32>
    %134 = vector.shape_cast %133 : vector<1x8x128xf32> to vector<8x128xf32>
    %135 = vector.shape_cast %129 : vector<8x128xf32> to vector<1x8x128xf32>
    tpu.vector_store %arg2[%c13, %c0_122, %c0_123], %135 {strides = array<i32>} : memref<36x8x128xf32, #tpu.memory_space<vmem>>, vector<1x8x128xf32>,
    %c1_124 = arith.constant 1 : index
    %c0_125 = arith.constant 0 : index
    %c0_126 = arith.constant 0 : index
    %136 = vector.load %arg1[%c1_124, %c0_125, %c0_126] : memref<21x8x128xf32, #tpu.memory_space<vmem>>, vector<1x8x128xf32>
    %137 = vector.shape_cast %136 : vector<1x8x128xf32> to vector<8x128xf32>
    %c6_127 = arith.constant 6 : index
    %c0_128 = arith.constant 0 : index
    %c0_129 = arith.constant 0 : index
    %138 = vector.load %arg1[%c6_127, %c0_128, %c0_129] : memref<21x8x128xf32, #tpu.memory_space<vmem>>, vector<1x8x128xf32>
    %139 = vector.shape_cast %138 : vector<1x8x128xf32> to vector<8x128xf32>
    %140 = arith.mulf %137, %139 : vector<8x128xf32>
    %c1_130 = arith.constant 1 : index
    %c0_131 = arith.constant 0 : index
    %c0_132 = arith.constant 0 : index
    %141 = vector.load %arg3[%c1_130, %c0_131, %c0_132] : memref<6x8x128xf32, #tpu.memory_space<vmem>>, vector<1x8x128xf32>
    %142 = vector.shape_cast %141 : vector<1x8x128xf32> to vector<8x128xf32>
    %c7_133 = arith.constant 7 : index
    %c0_134 = arith.constant 0 : index
    %c0_135 = arith.constant 0 : index
    %143 = vector.load %arg1[%c7_133, %c0_134, %c0_135] : memref<21x8x128xf32, #tpu.memory_space<vmem>>, vector<1x8x128xf32>
    %144 = vector.shape_cast %143 : vector<1x8x128xf32> to vector<8x128xf32>
    %145 = arith.mulf %142, %144 : vector<8x128xf32>
    %146 = arith.addf %140, %145 : vector<8x128xf32>
    %c9_136 = arith.constant 9 : index
    %c0_137 = arith.constant 0 : index
    %c0_138 = arith.constant 0 : index
    %147 = vector.load %arg2[%c9_136, %c0_137, %c0_138] : memref<36x8x128xf32, #tpu.memory_space<vmem>>, vector<1x8x128xf32>
    %148 = vector.shape_cast %147 : vector<1x8x128xf32> to vector<8x128xf32>
    %149 = vector.shape_cast %146 : vector<8x128xf32> to vector<1x8x128xf32>
    tpu.vector_store %arg2[%c9_136, %c0_137, %c0_138], %149 {strides = array<i32>} : memref<36x8x128xf32, #tpu.memory_space<vmem>>, vector<1x8x128xf32>,
    %c19 = arith.constant 19 : index
    %c0_139 = arith.constant 0 : index
    %c0_140 = arith.constant 0 : index
    %150 = vector.load %arg2[%c19, %c0_139, %c0_140] : memref<36x8x128xf32, #tpu.memory_space<vmem>>, vector<1x8x128xf32>
    %151 = vector.shape_cast %150 : vector<1x8x128xf32> to vector<8x128xf32>
    %152 = vector.shape_cast %146 : vector<8x128xf32> to vector<1x8x128xf32>
    tpu.vector_store %arg2[%c19, %c0_139, %c0_140], %152 {strides = array<i32>} : memref<36x8x128xf32, #tpu.memory_space<vmem>>, vector<1x8x128xf32>,
    %c1_141 = arith.constant 1 : index
    %c0_142 = arith.constant 0 : index
    %c0_143 = arith.constant 0 : index
    %153 = vector.load %arg1[%c1_141, %c0_142, %c0_143] : memref<21x8x128xf32, #tpu.memory_space<vmem>>, vector<1x8x128xf32>
    %154 = vector.shape_cast %153 : vector<1x8x128xf32> to vector<8x128xf32>
    %c10_144 = arith.constant 10 : index
    %c0_145 = arith.constant 0 : index
    %c0_146 = arith.constant 0 : index
    %155 = vector.load %arg1[%c10_144, %c0_145, %c0_146] : memref<21x8x128xf32, #tpu.memory_space<vmem>>, vector<1x8x128xf32>
    %156 = vector.shape_cast %155 : vector<1x8x128xf32> to vector<8x128xf32>
    %157 = arith.mulf %154, %156 : vector<8x128xf32>
    %c1_147 = arith.constant 1 : index
    %c0_148 = arith.constant 0 : index
    %c0_149 = arith.constant 0 : index
    %158 = vector.load %arg3[%c1_147, %c0_148, %c0_149] : memref<6x8x128xf32, #tpu.memory_space<vmem>>, vector<1x8x128xf32>
    %159 = vector.shape_cast %158 : vector<1x8x128xf32> to vector<8x128xf32>
    %c11 = arith.constant 11 : index
    %c0_150 = arith.constant 0 : index
    %c0_151 = arith.constant 0 : index
    %160 = vector.load %arg1[%c11, %c0_150, %c0_151] : memref<21x8x128xf32, #tpu.memory_space<vmem>>, vector<1x8x128xf32>
    %161 = vector.shape_cast %160 : vector<1x8x128xf32> to vector<8x128xf32>
    %162 = arith.mulf %159, %161 : vector<8x128xf32>
    %163 = arith.addf %157, %162 : vector<8x128xf32>
    %c10_152 = arith.constant 10 : index
    %c0_153 = arith.constant 0 : index
    %c0_154 = arith.constant 0 : index
    %164 = vector.load %arg2[%c10_152, %c0_153, %c0_154] : memref<36x8x128xf32, #tpu.memory_space<vmem>>, vector<1x8x128xf32>
    %165 = vector.shape_cast %164 : vector<1x8x128xf32> to vector<8x128xf32>
    %166 = vector.shape_cast %163 : vector<8x128xf32> to vector<1x8x128xf32>
    tpu.vector_store %arg2[%c10_152, %c0_153, %c0_154], %166 {strides = array<i32>} : memref<36x8x128xf32, #tpu.memory_space<vmem>>, vector<1x8x128xf32>,
    %c25 = arith.constant 25 : index
    %c0_155 = arith.constant 0 : index
    %c0_156 = arith.constant 0 : index
    %167 = vector.load %arg2[%c25, %c0_155, %c0_156] : memref<36x8x128xf32, #tpu.memory_space<vmem>>, vector<1x8x128xf32>
    %168 = vector.shape_cast %167 : vector<1x8x128xf32> to vector<8x128xf32>
    %169 = vector.shape_cast %163 : vector<8x128xf32> to vector<1x8x128xf32>
    tpu.vector_store %arg2[%c25, %c0_155, %c0_156], %169 {strides = array<i32>} : memref<36x8x128xf32, #tpu.memory_space<vmem>>, vector<1x8x128xf32>,
    %c1_157 = arith.constant 1 : index
    %c0_158 = arith.constant 0 : index
    %c0_159 = arith.constant 0 : index
    %170 = vector.load %arg1[%c1_157, %c0_158, %c0_159] : memref<21x8x128xf32, #tpu.memory_space<vmem>>, vector<1x8x128xf32>
    %171 = vector.shape_cast %170 : vector<1x8x128xf32> to vector<8x128xf32>
    %c15_160 = arith.constant 15 : index
    %c0_161 = arith.constant 0 : index
    %c0_162 = arith.constant 0 : index
    %172 = vector.load %arg1[%c15_160, %c0_161, %c0_162] : memref<21x8x128xf32, #tpu.memory_space<vmem>>, vector<1x8x128xf32>
    %173 = vector.shape_cast %172 : vector<1x8x128xf32> to vector<8x128xf32>
    %174 = arith.mulf %171, %173 : vector<8x128xf32>
    %c1_163 = arith.constant 1 : index
    %c0_164 = arith.constant 0 : index
    %c0_165 = arith.constant 0 : index
    %175 = vector.load %arg3[%c1_163, %c0_164, %c0_165] : memref<6x8x128xf32, #tpu.memory_space<vmem>>, vector<1x8x128xf32>
    %176 = vector.shape_cast %175 : vector<1x8x128xf32> to vector<8x128xf32>
    %c16 = arith.constant 16 : index
    %c0_166 = arith.constant 0 : index
    %c0_167 = arith.constant 0 : index
    %177 = vector.load %arg1[%c16, %c0_166, %c0_167] : memref<21x8x128xf32, #tpu.memory_space<vmem>>, vector<1x8x128xf32>
    %178 = vector.shape_cast %177 : vector<1x8x128xf32> to vector<8x128xf32>
    %179 = arith.mulf %176, %178 : vector<8x128xf32>
    %180 = arith.addf %174, %179 : vector<8x128xf32>
    %c11_168 = arith.constant 11 : index
    %c0_169 = arith.constant 0 : index
    %c0_170 = arith.constant 0 : index
    %181 = vector.load %arg2[%c11_168, %c0_169, %c0_170] : memref<36x8x128xf32, #tpu.memory_space<vmem>>, vector<1x8x128xf32>
    %182 = vector.shape_cast %181 : vector<1x8x128xf32> to vector<8x128xf32>
    %183 = vector.shape_cast %180 : vector<8x128xf32> to vector<1x8x128xf32>
    tpu.vector_store %arg2[%c11_168, %c0_169, %c0_170], %183 {strides = array<i32>} : memref<36x8x128xf32, #tpu.memory_space<vmem>>, vector<1x8x128xf32>,
    %c31 = arith.constant 31 : index
    %c0_171 = arith.constant 0 : index
    %c0_172 = arith.constant 0 : index
    %184 = vector.load %arg2[%c31, %c0_171, %c0_172] : memref<36x8x128xf32, #tpu.memory_space<vmem>>, vector<1x8x128xf32>
    %185 = vector.shape_cast %184 : vector<1x8x128xf32> to vector<8x128xf32>
    %186 = vector.shape_cast %180 : vector<8x128xf32> to vector<1x8x128xf32>
    tpu.vector_store %arg2[%c31, %c0_171, %c0_172], %186 {strides = array<i32>} : memref<36x8x128xf32, #tpu.memory_space<vmem>>, vector<1x8x128xf32>,
    %c3_173 = arith.constant 3 : index
    %c0_174 = arith.constant 0 : index
    %c0_175 = arith.constant 0 : index
    %187 = vector.load %arg1[%c3_173, %c0_174, %c0_175] : memref<21x8x128xf32, #tpu.memory_space<vmem>>, vector<1x8x128xf32>
    %188 = vector.shape_cast %187 : vector<1x8x128xf32> to vector<8x128xf32>
    %c3_176 = arith.constant 3 : index
    %c0_177 = arith.constant 0 : index
    %c0_178 = arith.constant 0 : index
    %189 = vector.load %arg1[%c3_176, %c0_177, %c0_178] : memref<21x8x128xf32, #tpu.memory_space<vmem>>, vector<1x8x128xf32>
    %190 = vector.shape_cast %189 : vector<1x8x128xf32> to vector<8x128xf32>
    %191 = arith.mulf %188, %190 : vector<8x128xf32>
    %c4_179 = arith.constant 4 : index
    %c0_180 = arith.constant 0 : index
    %c0_181 = arith.constant 0 : index
    %192 = vector.load %arg1[%c4_179, %c0_180, %c0_181] : memref<21x8x128xf32, #tpu.memory_space<vmem>>, vector<1x8x128xf32>
    %193 = vector.shape_cast %192 : vector<1x8x128xf32> to vector<8x128xf32>
    %c4_182 = arith.constant 4 : index
    %c0_183 = arith.constant 0 : index
    %c0_184 = arith.constant 0 : index
    %194 = vector.load %arg1[%c4_182, %c0_183, %c0_184] : memref<21x8x128xf32, #tpu.memory_space<vmem>>, vector<1x8x128xf32>
    %195 = vector.shape_cast %194 : vector<1x8x128xf32> to vector<8x128xf32>
    %196 = arith.mulf %193, %195 : vector<8x128xf32>
    %197 = arith.addf %191, %196 : vector<8x128xf32>
    %c2_185 = arith.constant 2 : index
    %c0_186 = arith.constant 0 : index
    %c0_187 = arith.constant 0 : index
    %198 = vector.load %arg3[%c2_185, %c0_186, %c0_187] : memref<6x8x128xf32, #tpu.memory_space<vmem>>, vector<1x8x128xf32>
    %199 = vector.shape_cast %198 : vector<1x8x128xf32> to vector<8x128xf32>
    %c2_188 = arith.constant 2 : index
    %c0_189 = arith.constant 0 : index
    %c0_190 = arith.constant 0 : index
    %200 = vector.load %arg3[%c2_188, %c0_189, %c0_190] : memref<6x8x128xf32, #tpu.memory_space<vmem>>, vector<1x8x128xf32>
    %201 = vector.shape_cast %200 : vector<1x8x128xf32> to vector<8x128xf32>
    %202 = arith.mulf %199, %201 : vector<8x128xf32>
    %203 = arith.addf %197, %202 : vector<8x128xf32>
    %c14_191 = arith.constant 14 : index
    %c0_192 = arith.constant 0 : index
    %c0_193 = arith.constant 0 : index
    %204 = vector.load %arg2[%c14_191, %c0_192, %c0_193] : memref<36x8x128xf32, #tpu.memory_space<vmem>>, vector<1x8x128xf32>
    %205 = vector.shape_cast %204 : vector<1x8x128xf32> to vector<8x128xf32>
    %206 = vector.shape_cast %203 : vector<8x128xf32> to vector<1x8x128xf32>
    tpu.vector_store %arg2[%c14_191, %c0_192, %c0_193], %206 {strides = array<i32>} : memref<36x8x128xf32, #tpu.memory_space<vmem>>, vector<1x8x128xf32>,
    %c3_194 = arith.constant 3 : index
    %c0_195 = arith.constant 0 : index
    %c0_196 = arith.constant 0 : index
    %207 = vector.load %arg1[%c3_194, %c0_195, %c0_196] : memref<21x8x128xf32, #tpu.memory_space<vmem>>, vector<1x8x128xf32>
    %208 = vector.shape_cast %207 : vector<1x8x128xf32> to vector<8x128xf32>
    %c6_197 = arith.constant 6 : index
    %c0_198 = arith.constant 0 : index
    %c0_199 = arith.constant 0 : index
    %209 = vector.load %arg1[%c6_197, %c0_198, %c0_199] : memref<21x8x128xf32, #tpu.memory_space<vmem>>, vector<1x8x128xf32>
    %210 = vector.shape_cast %209 : vector<1x8x128xf32> to vector<8x128xf32>
    %211 = arith.mulf %208, %210 : vector<8x128xf32>
    %c4_200 = arith.constant 4 : index
    %c0_201 = arith.constant 0 : index
    %c0_202 = arith.constant 0 : index
    %212 = vector.load %arg1[%c4_200, %c0_201, %c0_202] : memref<21x8x128xf32, #tpu.memory_space<vmem>>, vector<1x8x128xf32>
    %213 = vector.shape_cast %212 : vector<1x8x128xf32> to vector<8x128xf32>
    %c7_203 = arith.constant 7 : index
    %c0_204 = arith.constant 0 : index
    %c0_205 = arith.constant 0 : index
    %214 = vector.load %arg1[%c7_203, %c0_204, %c0_205] : memref<21x8x128xf32, #tpu.memory_space<vmem>>, vector<1x8x128xf32>
    %215 = vector.shape_cast %214 : vector<1x8x128xf32> to vector<8x128xf32>
    %216 = arith.mulf %213, %215 : vector<8x128xf32>
    %217 = arith.addf %211, %216 : vector<8x128xf32>
    %c2_206 = arith.constant 2 : index
    %c0_207 = arith.constant 0 : index
    %c0_208 = arith.constant 0 : index
    %218 = vector.load %arg3[%c2_206, %c0_207, %c0_208] : memref<6x8x128xf32, #tpu.memory_space<vmem>>, vector<1x8x128xf32>
    %219 = vector.shape_cast %218 : vector<1x8x128xf32> to vector<8x128xf32>
    %c8_209 = arith.constant 8 : index
    %c0_210 = arith.constant 0 : index
    %c0_211 = arith.constant 0 : index
    %220 = vector.load %arg1[%c8_209, %c0_210, %c0_211] : memref<21x8x128xf32, #tpu.memory_space<vmem>>, vector<1x8x128xf32>
    %221 = vector.shape_cast %220 : vector<1x8x128xf32> to vector<8x128xf32>
    %222 = arith.mulf %219, %221 : vector<8x128xf32>
    %223 = arith.addf %217, %222 : vector<8x128xf32>
    %c15_212 = arith.constant 15 : index
    %c0_213 = arith.constant 0 : index
    %c0_214 = arith.constant 0 : index
    %224 = vector.load %arg2[%c15_212, %c0_213, %c0_214] : memref<36x8x128xf32, #tpu.memory_space<vmem>>, vector<1x8x128xf32>
    %225 = vector.shape_cast %224 : vector<1x8x128xf32> to vector<8x128xf32>
    %226 = vector.shape_cast %223 : vector<8x128xf32> to vector<1x8x128xf32>
    tpu.vector_store %arg2[%c15_212, %c0_213, %c0_214], %226 {strides = array<i32>} : memref<36x8x128xf32, #tpu.memory_space<vmem>>, vector<1x8x128xf32>,
    %c20_215 = arith.constant 20 : index
    %c0_216 = arith.constant 0 : index
    %c0_217 = arith.constant 0 : index
    %227 = vector.load %arg2[%c20_215, %c0_216, %c0_217] : memref<36x8x128xf32, #tpu.memory_space<vmem>>, vector<1x8x128xf32>
    %228 = vector.shape_cast %227 : vector<1x8x128xf32> to vector<8x128xf32>
    %229 = vector.shape_cast %223 : vector<8x128xf32> to vector<1x8x128xf32>
    tpu.vector_store %arg2[%c20_215, %c0_216, %c0_217], %229 {strides = array<i32>} : memref<36x8x128xf32, #tpu.memory_space<vmem>>, vector<1x8x128xf32>,
    %c3_218 = arith.constant 3 : index
    %c0_219 = arith.constant 0 : index
    %c0_220 = arith.constant 0 : index
    %230 = vector.load %arg1[%c3_218, %c0_219, %c0_220] : memref<21x8x128xf32, #tpu.memory_space<vmem>>, vector<1x8x128xf32>
    %231 = vector.shape_cast %230 : vector<1x8x128xf32> to vector<8x128xf32>
    %c10_221 = arith.constant 10 : index
    %c0_222 = arith.constant 0 : index
    %c0_223 = arith.constant 0 : index
    %232 = vector.load %arg1[%c10_221, %c0_222, %c0_223] : memref<21x8x128xf32, #tpu.memory_space<vmem>>, vector<1x8x128xf32>
    %233 = vector.shape_cast %232 : vector<1x8x128xf32> to vector<8x128xf32>
    %234 = arith.mulf %231, %233 : vector<8x128xf32>
    %c4_224 = arith.constant 4 : index
    %c0_225 = arith.constant 0 : index
    %c0_226 = arith.constant 0 : index
    %235 = vector.load %arg1[%c4_224, %c0_225, %c0_226] : memref<21x8x128xf32, #tpu.memory_space<vmem>>, vector<1x8x128xf32>
    %236 = vector.shape_cast %235 : vector<1x8x128xf32> to vector<8x128xf32>
    %c11_227 = arith.constant 11 : index
    %c0_228 = arith.constant 0 : index
    %c0_229 = arith.constant 0 : index
    %237 = vector.load %arg1[%c11_227, %c0_228, %c0_229] : memref<21x8x128xf32, #tpu.memory_space<vmem>>, vector<1x8x128xf32>
    %238 = vector.shape_cast %237 : vector<1x8x128xf32> to vector<8x128xf32>
    %239 = arith.mulf %236, %238 : vector<8x128xf32>
    %240 = arith.addf %234, %239 : vector<8x128xf32>
    %c2_230 = arith.constant 2 : index
    %c0_231 = arith.constant 0 : index
    %c0_232 = arith.constant 0 : index
    %241 = vector.load %arg3[%c2_230, %c0_231, %c0_232] : memref<6x8x128xf32, #tpu.memory_space<vmem>>, vector<1x8x128xf32>
    %242 = vector.shape_cast %241 : vector<1x8x128xf32> to vector<8x128xf32>
    %c12_233 = arith.constant 12 : index
    %c0_234 = arith.constant 0 : index
    %c0_235 = arith.constant 0 : index
    %243 = vector.load %arg1[%c12_233, %c0_234, %c0_235] : memref<21x8x128xf32, #tpu.memory_space<vmem>>, vector<1x8x128xf32>
    %244 = vector.shape_cast %243 : vector<1x8x128xf32> to vector<8x128xf32>
    %245 = arith.mulf %242, %244 : vector<8x128xf32>
    %246 = arith.addf %240, %245 : vector<8x128xf32>
    %c16_236 = arith.constant 16 : index
    %c0_237 = arith.constant 0 : index
    %c0_238 = arith.constant 0 : index
    %247 = vector.load %arg2[%c16_236, %c0_237, %c0_238] : memref<36x8x128xf32, #tpu.memory_space<vmem>>, vector<1x8x128xf32>
    %248 = vector.shape_cast %247 : vector<1x8x128xf32> to vector<8x128xf32>
    %249 = vector.shape_cast %246 : vector<8x128xf32> to vector<1x8x128xf32>
    tpu.vector_store %arg2[%c16_236, %c0_237, %c0_238], %249 {strides = array<i32>} : memref<36x8x128xf32, #tpu.memory_space<vmem>>, vector<1x8x128xf32>,
    %c26 = arith.constant 26 : index
    %c0_239 = arith.constant 0 : index
    %c0_240 = arith.constant 0 : index
    %250 = vector.load %arg2[%c26, %c0_239, %c0_240] : memref<36x8x128xf32, #tpu.memory_space<vmem>>, vector<1x8x128xf32>
    %251 = vector.shape_cast %250 : vector<1x8x128xf32> to vector<8x128xf32>
    %252 = vector.shape_cast %246 : vector<8x128xf32> to vector<1x8x128xf32>
    tpu.vector_store %arg2[%c26, %c0_239, %c0_240], %252 {strides = array<i32>} : memref<36x8x128xf32, #tpu.memory_space<vmem>>, vector<1x8x128xf32>,
    %c3_241 = arith.constant 3 : index
    %c0_242 = arith.constant 0 : index
    %c0_243 = arith.constant 0 : index
    %253 = vector.load %arg1[%c3_241, %c0_242, %c0_243] : memref<21x8x128xf32, #tpu.memory_space<vmem>>, vector<1x8x128xf32>
    %254 = vector.shape_cast %253 : vector<1x8x128xf32> to vector<8x128xf32>
    %c15_244 = arith.constant 15 : index
    %c0_245 = arith.constant 0 : index
    %c0_246 = arith.constant 0 : index
    %255 = vector.load %arg1[%c15_244, %c0_245, %c0_246] : memref<21x8x128xf32, #tpu.memory_space<vmem>>, vector<1x8x128xf32>
    %256 = vector.shape_cast %255 : vector<1x8x128xf32> to vector<8x128xf32>
    %257 = arith.mulf %254, %256 : vector<8x128xf32>
    %c4_247 = arith.constant 4 : index
    %c0_248 = arith.constant 0 : index
    %c0_249 = arith.constant 0 : index
    %258 = vector.load %arg1[%c4_247, %c0_248, %c0_249] : memref<21x8x128xf32, #tpu.memory_space<vmem>>, vector<1x8x128xf32>
    %259 = vector.shape_cast %258 : vector<1x8x128xf32> to vector<8x128xf32>
    %c16_250 = arith.constant 16 : index
    %c0_251 = arith.constant 0 : index
    %c0_252 = arith.constant 0 : index
    %260 = vector.load %arg1[%c16_250, %c0_251, %c0_252] : memref<21x8x128xf32, #tpu.memory_space<vmem>>, vector<1x8x128xf32>
    %261 = vector.shape_cast %260 : vector<1x8x128xf32> to vector<8x128xf32>
    %262 = arith.mulf %259, %261 : vector<8x128xf32>
    %263 = arith.addf %257, %262 : vector<8x128xf32>
    %c2_253 = arith.constant 2 : index
    %c0_254 = arith.constant 0 : index
    %c0_255 = arith.constant 0 : index
    %264 = vector.load %arg3[%c2_253, %c0_254, %c0_255] : memref<6x8x128xf32, #tpu.memory_space<vmem>>, vector<1x8x128xf32>
    %265 = vector.shape_cast %264 : vector<1x8x128xf32> to vector<8x128xf32>
    %c17 = arith.constant 17 : index
    %c0_256 = arith.constant 0 : index
    %c0_257 = arith.constant 0 : index
    %266 = vector.load %arg1[%c17, %c0_256, %c0_257] : memref<21x8x128xf32, #tpu.memory_space<vmem>>, vector<1x8x128xf32>
    %267 = vector.shape_cast %266 : vector<1x8x128xf32> to vector<8x128xf32>
    %268 = arith.mulf %265, %267 : vector<8x128xf32>
    %269 = arith.addf %263, %268 : vector<8x128xf32>
    %c17_258 = arith.constant 17 : index
    %c0_259 = arith.constant 0 : index
    %c0_260 = arith.constant 0 : index
    %270 = vector.load %arg2[%c17_258, %c0_259, %c0_260] : memref<36x8x128xf32, #tpu.memory_space<vmem>>, vector<1x8x128xf32>
    %271 = vector.shape_cast %270 : vector<1x8x128xf32> to vector<8x128xf32>
    %272 = vector.shape_cast %269 : vector<8x128xf32> to vector<1x8x128xf32>
    tpu.vector_store %arg2[%c17_258, %c0_259, %c0_260], %272 {strides = array<i32>} : memref<36x8x128xf32, #tpu.memory_space<vmem>>, vector<1x8x128xf32>,
    %c32 = arith.constant 32 : index
    %c0_261 = arith.constant 0 : index
    %c0_262 = arith.constant 0 : index
    %273 = vector.load %arg2[%c32, %c0_261, %c0_262] : memref<36x8x128xf32, #tpu.memory_space<vmem>>, vector<1x8x128xf32>
    %274 = vector.shape_cast %273 : vector<1x8x128xf32> to vector<8x128xf32>
    %275 = vector.shape_cast %269 : vector<8x128xf32> to vector<1x8x128xf32>
    tpu.vector_store %arg2[%c32, %c0_261, %c0_262], %275 {strides = array<i32>} : memref<36x8x128xf32, #tpu.memory_space<vmem>>, vector<1x8x128xf32>,
    %c6_263 = arith.constant 6 : index
    %c0_264 = arith.constant 0 : index
    %c0_265 = arith.constant 0 : index
    %276 = vector.load %arg1[%c6_263, %c0_264, %c0_265] : memref<21x8x128xf32, #tpu.memory_space<vmem>>, vector<1x8x128xf32>
    %277 = vector.shape_cast %276 : vector<1x8x128xf32> to vector<8x128xf32>
    %c6_266 = arith.constant 6 : index
    %c0_267 = arith.constant 0 : index
    %c0_268 = arith.constant 0 : index
    %278 = vector.load %arg1[%c6_266, %c0_267, %c0_268] : memref<21x8x128xf32, #tpu.memory_space<vmem>>, vector<1x8x128xf32>
    %279 = vector.shape_cast %278 : vector<1x8x128xf32> to vector<8x128xf32>
    %280 = arith.mulf %277, %279 : vector<8x128xf32>
    %c7_269 = arith.constant 7 : index
    %c0_270 = arith.constant 0 : index
    %c0_271 = arith.constant 0 : index
    %281 = vector.load %arg1[%c7_269, %c0_270, %c0_271] : memref<21x8x128xf32, #tpu.memory_space<vmem>>, vector<1x8x128xf32>
    %282 = vector.shape_cast %281 : vector<1x8x128xf32> to vector<8x128xf32>
    %c7_272 = arith.constant 7 : index
    %c0_273 = arith.constant 0 : index
    %c0_274 = arith.constant 0 : index
    %283 = vector.load %arg1[%c7_272, %c0_273, %c0_274] : memref<21x8x128xf32, #tpu.memory_space<vmem>>, vector<1x8x128xf32>
    %284 = vector.shape_cast %283 : vector<1x8x128xf32> to vector<8x128xf32>
    %285 = arith.mulf %282, %284 : vector<8x128xf32>
    %286 = arith.addf %280, %285 : vector<8x128xf32>
    %c8_275 = arith.constant 8 : index
    %c0_276 = arith.constant 0 : index
    %c0_277 = arith.constant 0 : index
    %287 = vector.load %arg1[%c8_275, %c0_276, %c0_277] : memref<21x8x128xf32, #tpu.memory_space<vmem>>, vector<1x8x128xf32>
    %288 = vector.shape_cast %287 : vector<1x8x128xf32> to vector<8x128xf32>
    %c8_278 = arith.constant 8 : index
    %c0_279 = arith.constant 0 : index
    %c0_280 = arith.constant 0 : index
    %289 = vector.load %arg1[%c8_278, %c0_279, %c0_280] : memref<21x8x128xf32, #tpu.memory_space<vmem>>, vector<1x8x128xf32>
    %290 = vector.shape_cast %289 : vector<1x8x128xf32> to vector<8x128xf32>
    %291 = arith.mulf %288, %290 : vector<8x128xf32>
    %292 = arith.addf %286, %291 : vector<8x128xf32>
    %c3_281 = arith.constant 3 : index
    %c0_282 = arith.constant 0 : index
    %c0_283 = arith.constant 0 : index
    %293 = vector.load %arg3[%c3_281, %c0_282, %c0_283] : memref<6x8x128xf32, #tpu.memory_space<vmem>>, vector<1x8x128xf32>
    %294 = vector.shape_cast %293 : vector<1x8x128xf32> to vector<8x128xf32>
    %c3_284 = arith.constant 3 : index
    %c0_285 = arith.constant 0 : index
    %c0_286 = arith.constant 0 : index
    %295 = vector.load %arg3[%c3_284, %c0_285, %c0_286] : memref<6x8x128xf32, #tpu.memory_space<vmem>>, vector<1x8x128xf32>
    %296 = vector.shape_cast %295 : vector<1x8x128xf32> to vector<8x128xf32>
    %297 = arith.mulf %294, %296 : vector<8x128xf32>
    %298 = arith.addf %292, %297 : vector<8x128xf32>
    %c21 = arith.constant 21 : index
    %c0_287 = arith.constant 0 : index
    %c0_288 = arith.constant 0 : index
    %299 = vector.load %arg2[%c21, %c0_287, %c0_288] : memref<36x8x128xf32, #tpu.memory_space<vmem>>, vector<1x8x128xf32>
    %300 = vector.shape_cast %299 : vector<1x8x128xf32> to vector<8x128xf32>
    %301 = vector.shape_cast %298 : vector<8x128xf32> to vector<1x8x128xf32>
    tpu.vector_store %arg2[%c21, %c0_287, %c0_288], %301 {strides = array<i32>} : memref<36x8x128xf32, #tpu.memory_space<vmem>>, vector<1x8x128xf32>,
    %c6_289 = arith.constant 6 : index
    %c0_290 = arith.constant 0 : index
    %c0_291 = arith.constant 0 : index
    %302 = vector.load %arg1[%c6_289, %c0_290, %c0_291] : memref<21x8x128xf32, #tpu.memory_space<vmem>>, vector<1x8x128xf32>
    %303 = vector.shape_cast %302 : vector<1x8x128xf32> to vector<8x128xf32>
    %c10_292 = arith.constant 10 : index
    %c0_293 = arith.constant 0 : index
    %c0_294 = arith.constant 0 : index
    %304 = vector.load %arg1[%c10_292, %c0_293, %c0_294] : memref<21x8x128xf32, #tpu.memory_space<vmem>>, vector<1x8x128xf32>
    %305 = vector.shape_cast %304 : vector<1x8x128xf32> to vector<8x128xf32>
    %306 = arith.mulf %303, %305 : vector<8x128xf32>
    %c7_295 = arith.constant 7 : index
    %c0_296 = arith.constant 0 : index
    %c0_297 = arith.constant 0 : index
    %307 = vector.load %arg1[%c7_295, %c0_296, %c0_297] : memref<21x8x128xf32, #tpu.memory_space<vmem>>, vector<1x8x128xf32>
    %308 = vector.shape_cast %307 : vector<1x8x128xf32> to vector<8x128xf32>
    %c11_298 = arith.constant 11 : index
    %c0_299 = arith.constant 0 : index
    %c0_300 = arith.constant 0 : index
    %309 = vector.load %arg1[%c11_298, %c0_299, %c0_300] : memref<21x8x128xf32, #tpu.memory_space<vmem>>, vector<1x8x128xf32>
    %310 = vector.shape_cast %309 : vector<1x8x128xf32> to vector<8x128xf32>
    %311 = arith.mulf %308, %310 : vector<8x128xf32>
    %312 = arith.addf %306, %311 : vector<8x128xf32>
    %c8_301 = arith.constant 8 : index
    %c0_302 = arith.constant 0 : index
    %c0_303 = arith.constant 0 : index
    %313 = vector.load %arg1[%c8_301, %c0_302, %c0_303] : memref<21x8x128xf32, #tpu.memory_space<vmem>>, vector<1x8x128xf32>
    %314 = vector.shape_cast %313 : vector<1x8x128xf32> to vector<8x128xf32>
    %c12_304 = arith.constant 12 : index
    %c0_305 = arith.constant 0 : index
    %c0_306 = arith.constant 0 : index
    %315 = vector.load %arg1[%c12_304, %c0_305, %c0_306] : memref<21x8x128xf32, #tpu.memory_space<vmem>>, vector<1x8x128xf32>
    %316 = vector.shape_cast %315 : vector<1x8x128xf32> to vector<8x128xf32>
    %317 = arith.mulf %314, %316 : vector<8x128xf32>
    %318 = arith.addf %312, %317 : vector<8x128xf32>
    %c3_307 = arith.constant 3 : index
    %c0_308 = arith.constant 0 : index
    %c0_309 = arith.constant 0 : index
    %319 = vector.load %arg3[%c3_307, %c0_308, %c0_309] : memref<6x8x128xf32, #tpu.memory_space<vmem>>, vector<1x8x128xf32>
    %320 = vector.shape_cast %319 : vector<1x8x128xf32> to vector<8x128xf32>
    %c13_310 = arith.constant 13 : index
    %c0_311 = arith.constant 0 : index
    %c0_312 = arith.constant 0 : index
    %321 = vector.load %arg1[%c13_310, %c0_311, %c0_312] : memref<21x8x128xf32, #tpu.memory_space<vmem>>, vector<1x8x128xf32>
    %322 = vector.shape_cast %321 : vector<1x8x128xf32> to vector<8x128xf32>
    %323 = arith.mulf %320, %322 : vector<8x128xf32>
    %324 = arith.addf %318, %323 : vector<8x128xf32>
    %c22 = arith.constant 22 : index
    %c0_313 = arith.constant 0 : index
    %c0_314 = arith.constant 0 : index
    %325 = vector.load %arg2[%c22, %c0_313, %c0_314] : memref<36x8x128xf32, #tpu.memory_space<vmem>>, vector<1x8x128xf32>
    %326 = vector.shape_cast %325 : vector<1x8x128xf32> to vector<8x128xf32>
    %327 = vector.shape_cast %324 : vector<8x128xf32> to vector<1x8x128xf32>
    tpu.vector_store %arg2[%c22, %c0_313, %c0_314], %327 {strides = array<i32>} : memref<36x8x128xf32, #tpu.memory_space<vmem>>, vector<1x8x128xf32>,
    %c27 = arith.constant 27 : index
    %c0_315 = arith.constant 0 : index
    %c0_316 = arith.constant 0 : index
    %328 = vector.load %arg2[%c27, %c0_315, %c0_316] : memref<36x8x128xf32, #tpu.memory_space<vmem>>, vector<1x8x128xf32>
    %329 = vector.shape_cast %328 : vector<1x8x128xf32> to vector<8x128xf32>
    %330 = vector.shape_cast %324 : vector<8x128xf32> to vector<1x8x128xf32>
    tpu.vector_store %arg2[%c27, %c0_315, %c0_316], %330 {strides = array<i32>} : memref<36x8x128xf32, #tpu.memory_space<vmem>>, vector<1x8x128xf32>,
    %c6_317 = arith.constant 6 : index
    %c0_318 = arith.constant 0 : index
    %c0_319 = arith.constant 0 : index
    %331 = vector.load %arg1[%c6_317, %c0_318, %c0_319] : memref<21x8x128xf32, #tpu.memory_space<vmem>>, vector<1x8x128xf32>
    %332 = vector.shape_cast %331 : vector<1x8x128xf32> to vector<8x128xf32>
    %c15_320 = arith.constant 15 : index
    %c0_321 = arith.constant 0 : index
    %c0_322 = arith.constant 0 : index
    %333 = vector.load %arg1[%c15_320, %c0_321, %c0_322] : memref<21x8x128xf32, #tpu.memory_space<vmem>>, vector<1x8x128xf32>
    %334 = vector.shape_cast %333 : vector<1x8x128xf32> to vector<8x128xf32>
    %335 = arith.mulf %332, %334 : vector<8x128xf32>
    %c7_323 = arith.constant 7 : index
    %c0_324 = arith.constant 0 : index
    %c0_325 = arith.constant 0 : index
    %336 = vector.load %arg1[%c7_323, %c0_324, %c0_325] : memref<21x8x128xf32, #tpu.memory_space<vmem>>, vector<1x8x128xf32>
    %337 = vector.shape_cast %336 : vector<1x8x128xf32> to vector<8x128xf32>
    %c16_326 = arith.constant 16 : index
    %c0_327 = arith.constant 0 : index
    %c0_328 = arith.constant 0 : index
    %338 = vector.load %arg1[%c16_326, %c0_327, %c0_328] : memref<21x8x128xf32, #tpu.memory_space<vmem>>, vector<1x8x128xf32>
    %339 = vector.shape_cast %338 : vector<1x8x128xf32> to vector<8x128xf32>
    %340 = arith.mulf %337, %339 : vector<8x128xf32>
    %341 = arith.addf %335, %340 : vector<8x128xf32>
    %c8_329 = arith.constant 8 : index
    %c0_330 = arith.constant 0 : index
    %c0_331 = arith.constant 0 : index
    %342 = vector.load %arg1[%c8_329, %c0_330, %c0_331] : memref<21x8x128xf32, #tpu.memory_space<vmem>>, vector<1x8x128xf32>
    %343 = vector.shape_cast %342 : vector<1x8x128xf32> to vector<8x128xf32>
    %c17_332 = arith.constant 17 : index
    %c0_333 = arith.constant 0 : index
    %c0_334 = arith.constant 0 : index
    %344 = vector.load %arg1[%c17_332, %c0_333, %c0_334] : memref<21x8x128xf32, #tpu.memory_space<vmem>>, vector<1x8x128xf32>
    %345 = vector.shape_cast %344 : vector<1x8x128xf32> to vector<8x128xf32>
    %346 = arith.mulf %343, %345 : vector<8x128xf32>
    %347 = arith.addf %341, %346 : vector<8x128xf32>
    %c3_335 = arith.constant 3 : index
    %c0_336 = arith.constant 0 : index
    %c0_337 = arith.constant 0 : index
    %348 = vector.load %arg3[%c3_335, %c0_336, %c0_337] : memref<6x8x128xf32, #tpu.memory_space<vmem>>, vector<1x8x128xf32>
    %349 = vector.shape_cast %348 : vector<1x8x128xf32> to vector<8x128xf32>
    %c18_338 = arith.constant 18 : index
    %c0_339 = arith.constant 0 : index
    %c0_340 = arith.constant 0 : index
    %350 = vector.load %arg1[%c18_338, %c0_339, %c0_340] : memref<21x8x128xf32, #tpu.memory_space<vmem>>, vector<1x8x128xf32>
    %351 = vector.shape_cast %350 : vector<1x8x128xf32> to vector<8x128xf32>
    %352 = arith.mulf %349, %351 : vector<8x128xf32>
    %353 = arith.addf %347, %352 : vector<8x128xf32>
    %c23 = arith.constant 23 : index
    %c0_341 = arith.constant 0 : index
    %c0_342 = arith.constant 0 : index
    %354 = vector.load %arg2[%c23, %c0_341, %c0_342] : memref<36x8x128xf32, #tpu.memory_space<vmem>>, vector<1x8x128xf32>
    %355 = vector.shape_cast %354 : vector<1x8x128xf32> to vector<8x128xf32>
    %356 = vector.shape_cast %353 : vector<8x128xf32> to vector<1x8x128xf32>
    tpu.vector_store %arg2[%c23, %c0_341, %c0_342], %356 {strides = array<i32>} : memref<36x8x128xf32, #tpu.memory_space<vmem>>, vector<1x8x128xf32>,
    %c33 = arith.constant 33 : index
    %c0_343 = arith.constant 0 : index
    %c0_344 = arith.constant 0 : index
    %357 = vector.load %arg2[%c33, %c0_343, %c0_344] : memref<36x8x128xf32, #tpu.memory_space<vmem>>, vector<1x8x128xf32>
    %358 = vector.shape_cast %357 : vector<1x8x128xf32> to vector<8x128xf32>
    %359 = vector.shape_cast %353 : vector<8x128xf32> to vector<1x8x128xf32>
    tpu.vector_store %arg2[%c33, %c0_343, %c0_344], %359 {strides = array<i32>} : memref<36x8x128xf32, #tpu.memory_space<vmem>>, vector<1x8x128xf32>,
    %c10_345 = arith.constant 10 : index
    %c0_346 = arith.constant 0 : index
    %c0_347 = arith.constant 0 : index
    %360 = vector.load %arg1[%c10_345, %c0_346, %c0_347] : memref<21x8x128xf32, #tpu.memory_space<vmem>>, vector<1x8x128xf32>
    %361 = vector.shape_cast %360 : vector<1x8x128xf32> to vector<8x128xf32>
    %c10_348 = arith.constant 10 : index
    %c0_349 = arith.constant 0 : index
    %c0_350 = arith.constant 0 : index
    %362 = vector.load %arg1[%c10_348, %c0_349, %c0_350] : memref<21x8x128xf32, #tpu.memory_space<vmem>>, vector<1x8x128xf32>
    %363 = vector.shape_cast %362 : vector<1x8x128xf32> to vector<8x128xf32>
    %364 = arith.mulf %361, %363 : vector<8x128xf32>
    %c11_351 = arith.constant 11 : index
    %c0_352 = arith.constant 0 : index
    %c0_353 = arith.constant 0 : index
    %365 = vector.load %arg1[%c11_351, %c0_352, %c0_353] : memref<21x8x128xf32, #tpu.memory_space<vmem>>, vector<1x8x128xf32>
    %366 = vector.shape_cast %365 : vector<1x8x128xf32> to vector<8x128xf32>
    %c11_354 = arith.constant 11 : index
    %c0_355 = arith.constant 0 : index
    %c0_356 = arith.constant 0 : index
    %367 = vector.load %arg1[%c11_354, %c0_355, %c0_356] : memref<21x8x128xf32, #tpu.memory_space<vmem>>, vector<1x8x128xf32>
    %368 = vector.shape_cast %367 : vector<1x8x128xf32> to vector<8x128xf32>
    %369 = arith.mulf %366, %368 : vector<8x128xf32>
    %370 = arith.addf %364, %369 : vector<8x128xf32>
    %c12_357 = arith.constant 12 : index
    %c0_358 = arith.constant 0 : index
    %c0_359 = arith.constant 0 : index
    %371 = vector.load %arg1[%c12_357, %c0_358, %c0_359] : memref<21x8x128xf32, #tpu.memory_space<vmem>>, vector<1x8x128xf32>
    %372 = vector.shape_cast %371 : vector<1x8x128xf32> to vector<8x128xf32>
    %c12_360 = arith.constant 12 : index
    %c0_361 = arith.constant 0 : index
    %c0_362 = arith.constant 0 : index
    %373 = vector.load %arg1[%c12_360, %c0_361, %c0_362] : memref<21x8x128xf32, #tpu.memory_space<vmem>>, vector<1x8x128xf32>
    %374 = vector.shape_cast %373 : vector<1x8x128xf32> to vector<8x128xf32>
    %375 = arith.mulf %372, %374 : vector<8x128xf32>
    %376 = arith.addf %370, %375 : vector<8x128xf32>
    %c13_363 = arith.constant 13 : index
    %c0_364 = arith.constant 0 : index
    %c0_365 = arith.constant 0 : index
    %377 = vector.load %arg1[%c13_363, %c0_364, %c0_365] : memref<21x8x128xf32, #tpu.memory_space<vmem>>, vector<1x8x128xf32>
    %378 = vector.shape_cast %377 : vector<1x8x128xf32> to vector<8x128xf32>
    %c13_366 = arith.constant 13 : index
    %c0_367 = arith.constant 0 : index
    %c0_368 = arith.constant 0 : index
    %379 = vector.load %arg1[%c13_366, %c0_367, %c0_368] : memref<21x8x128xf32, #tpu.memory_space<vmem>>, vector<1x8x128xf32>
    %380 = vector.shape_cast %379 : vector<1x8x128xf32> to vector<8x128xf32>
    %381 = arith.mulf %378, %380 : vector<8x128xf32>
    %382 = arith.addf %376, %381 : vector<8x128xf32>
    %c4_369 = arith.constant 4 : index
    %c0_370 = arith.constant 0 : index
    %c0_371 = arith.constant 0 : index
    %383 = vector.load %arg3[%c4_369, %c0_370, %c0_371] : memref<6x8x128xf32, #tpu.memory_space<vmem>>, vector<1x8x128xf32>
    %384 = vector.shape_cast %383 : vector<1x8x128xf32> to vector<8x128xf32>
    %c4_372 = arith.constant 4 : index
    %c0_373 = arith.constant 0 : index
    %c0_374 = arith.constant 0 : index
    %385 = vector.load %arg3[%c4_372, %c0_373, %c0_374] : memref<6x8x128xf32, #tpu.memory_space<vmem>>, vector<1x8x128xf32>
    %386 = vector.shape_cast %385 : vector<1x8x128xf32> to vector<8x128xf32>
    %387 = arith.mulf %384, %386 : vector<8x128xf32>
    %388 = arith.addf %382, %387 : vector<8x128xf32>
    %c28 = arith.constant 28 : index
    %c0_375 = arith.constant 0 : index
    %c0_376 = arith.constant 0 : index
    %389 = vector.load %arg2[%c28, %c0_375, %c0_376] : memref<36x8x128xf32, #tpu.memory_space<vmem>>, vector<1x8x128xf32>
    %390 = vector.shape_cast %389 : vector<1x8x128xf32> to vector<8x128xf32>
    %391 = vector.shape_cast %388 : vector<8x128xf32> to vector<1x8x128xf32>
    tpu.vector_store %arg2[%c28, %c0_375, %c0_376], %391 {strides = array<i32>} : memref<36x8x128xf32, #tpu.memory_space<vmem>>, vector<1x8x128xf32>,
    %c10_377 = arith.constant 10 : index
    %c0_378 = arith.constant 0 : index
    %c0_379 = arith.constant 0 : index
    %392 = vector.load %arg1[%c10_377, %c0_378, %c0_379] : memref<21x8x128xf32, #tpu.memory_space<vmem>>, vector<1x8x128xf32>
    %393 = vector.shape_cast %392 : vector<1x8x128xf32> to vector<8x128xf32>
    %c15_380 = arith.constant 15 : index
    %c0_381 = arith.constant 0 : index
    %c0_382 = arith.constant 0 : index
    %394 = vector.load %arg1[%c15_380, %c0_381, %c0_382] : memref<21x8x128xf32, #tpu.memory_space<vmem>>, vector<1x8x128xf32>
    %395 = vector.shape_cast %394 : vector<1x8x128xf32> to vector<8x128xf32>
    %396 = arith.mulf %393, %395 : vector<8x128xf32>
    %c11_383 = arith.constant 11 : index
    %c0_384 = arith.constant 0 : index
    %c0_385 = arith.constant 0 : index
    %397 = vector.load %arg1[%c11_383, %c0_384, %c0_385] : memref<21x8x128xf32, #tpu.memory_space<vmem>>, vector<1x8x128xf32>
    %398 = vector.shape_cast %397 : vector<1x8x128xf32> to vector<8x128xf32>
    %c16_386 = arith.constant 16 : index
    %c0_387 = arith.constant 0 : index
    %c0_388 = arith.constant 0 : index
    %399 = vector.load %arg1[%c16_386, %c0_387, %c0_388] : memref<21x8x128xf32, #tpu.memory_space<vmem>>, vector<1x8x128xf32>
    %400 = vector.shape_cast %399 : vector<1x8x128xf32> to vector<8x128xf32>
    %401 = arith.mulf %398, %400 : vector<8x128xf32>
    %402 = arith.addf %396, %401 : vector<8x128xf32>
    %c12_389 = arith.constant 12 : index
    %c0_390 = arith.constant 0 : index
    %c0_391 = arith.constant 0 : index
    %403 = vector.load %arg1[%c12_389, %c0_390, %c0_391] : memref<21x8x128xf32, #tpu.memory_space<vmem>>, vector<1x8x128xf32>
    %404 = vector.shape_cast %403 : vector<1x8x128xf32> to vector<8x128xf32>
    %c17_392 = arith.constant 17 : index
    %c0_393 = arith.constant 0 : index
    %c0_394 = arith.constant 0 : index
    %405 = vector.load %arg1[%c17_392, %c0_393, %c0_394] : memref<21x8x128xf32, #tpu.memory_space<vmem>>, vector<1x8x128xf32>
    %406 = vector.shape_cast %405 : vector<1x8x128xf32> to vector<8x128xf32>
    %407 = arith.mulf %404, %406 : vector<8x128xf32>
    %408 = arith.addf %402, %407 : vector<8x128xf32>
    %c13_395 = arith.constant 13 : index
    %c0_396 = arith.constant 0 : index
    %c0_397 = arith.constant 0 : index
    %409 = vector.load %arg1[%c13_395, %c0_396, %c0_397] : memref<21x8x128xf32, #tpu.memory_space<vmem>>, vector<1x8x128xf32>
    %410 = vector.shape_cast %409 : vector<1x8x128xf32> to vector<8x128xf32>
    %c18_398 = arith.constant 18 : index
    %c0_399 = arith.constant 0 : index
    %c0_400 = arith.constant 0 : index
    %411 = vector.load %arg1[%c18_398, %c0_399, %c0_400] : memref<21x8x128xf32, #tpu.memory_space<vmem>>, vector<1x8x128xf32>
    %412 = vector.shape_cast %411 : vector<1x8x128xf32> to vector<8x128xf32>
    %413 = arith.mulf %410, %412 : vector<8x128xf32>
    %414 = arith.addf %408, %413 : vector<8x128xf32>
    %c4_401 = arith.constant 4 : index
    %c0_402 = arith.constant 0 : index
    %c0_403 = arith.constant 0 : index
    %415 = vector.load %arg3[%c4_401, %c0_402, %c0_403] : memref<6x8x128xf32, #tpu.memory_space<vmem>>, vector<1x8x128xf32>
    %416 = vector.shape_cast %415 : vector<1x8x128xf32> to vector<8x128xf32>
    %c19_404 = arith.constant 19 : index
    %c0_405 = arith.constant 0 : index
    %c0_406 = arith.constant 0 : index
    %417 = vector.load %arg1[%c19_404, %c0_405, %c0_406] : memref<21x8x128xf32, #tpu.memory_space<vmem>>, vector<1x8x128xf32>
    %418 = vector.shape_cast %417 : vector<1x8x128xf32> to vector<8x128xf32>
    %419 = arith.mulf %416, %418 : vector<8x128xf32>
    %420 = arith.addf %414, %419 : vector<8x128xf32>
    %c29 = arith.constant 29 : index
    %c0_407 = arith.constant 0 : index
    %c0_408 = arith.constant 0 : index
    %421 = vector.load %arg2[%c29, %c0_407, %c0_408] : memref<36x8x128xf32, #tpu.memory_space<vmem>>, vector<1x8x128xf32>
    %422 = vector.shape_cast %421 : vector<1x8x128xf32> to vector<8x128xf32>
    %423 = vector.shape_cast %420 : vector<8x128xf32> to vector<1x8x128xf32>
    tpu.vector_store %arg2[%c29, %c0_407, %c0_408], %423 {strides = array<i32>} : memref<36x8x128xf32, #tpu.memory_space<vmem>>, vector<1x8x128xf32>,
    %c34 = arith.constant 34 : index
    %c0_409 = arith.constant 0 : index
    %c0_410 = arith.constant 0 : index
    %424 = vector.load %arg2[%c34, %c0_409, %c0_410] : memref<36x8x128xf32, #tpu.memory_space<vmem>>, vector<1x8x128xf32>
    %425 = vector.shape_cast %424 : vector<1x8x128xf32> to vector<8x128xf32>
    %426 = vector.shape_cast %420 : vector<8x128xf32> to vector<1x8x128xf32>
    tpu.vector_store %arg2[%c34, %c0_409, %c0_410], %426 {strides = array<i32>} : memref<36x8x128xf32, #tpu.memory_space<vmem>>, vector<1x8x128xf32>,
    %c15_411 = arith.constant 15 : index
    %c0_412 = arith.constant 0 : index
    %c0_413 = arith.constant 0 : index
    %427 = vector.load %arg1[%c15_411, %c0_412, %c0_413] : memref<21x8x128xf32, #tpu.memory_space<vmem>>, vector<1x8x128xf32>
    %428 = vector.shape_cast %427 : vector<1x8x128xf32> to vector<8x128xf32>
    %c15_414 = arith.constant 15 : index
    %c0_415 = arith.constant 0 : index
    %c0_416 = arith.constant 0 : index
    %429 = vector.load %arg1[%c15_414, %c0_415, %c0_416] : memref<21x8x128xf32, #tpu.memory_space<vmem>>, vector<1x8x128xf32>
    %430 = vector.shape_cast %429 : vector<1x8x128xf32> to vector<8x128xf32>
    %431 = arith.mulf %428, %430 : vector<8x128xf32>
    %c16_417 = arith.constant 16 : index
    %c0_418 = arith.constant 0 : index
    %c0_419 = arith.constant 0 : index
    %432 = vector.load %arg1[%c16_417, %c0_418, %c0_419] : memref<21x8x128xf32, #tpu.memory_space<vmem>>, vector<1x8x128xf32>
    %433 = vector.shape_cast %432 : vector<1x8x128xf32> to vector<8x128xf32>
    %c16_420 = arith.constant 16 : index
    %c0_421 = arith.constant 0 : index
    %c0_422 = arith.constant 0 : index
    %434 = vector.load %arg1[%c16_420, %c0_421, %c0_422] : memref<21x8x128xf32, #tpu.memory_space<vmem>>, vector<1x8x128xf32>
    %435 = vector.shape_cast %434 : vector<1x8x128xf32> to vector<8x128xf32>
    %436 = arith.mulf %433, %435 : vector<8x128xf32>
    %437 = arith.addf %431, %436 : vector<8x128xf32>
    %c17_423 = arith.constant 17 : index
    %c0_424 = arith.constant 0 : index
    %c0_425 = arith.constant 0 : index
    %438 = vector.load %arg1[%c17_423, %c0_424, %c0_425] : memref<21x8x128xf32, #tpu.memory_space<vmem>>, vector<1x8x128xf32>
    %439 = vector.shape_cast %438 : vector<1x8x128xf32> to vector<8x128xf32>
    %c17_426 = arith.constant 17 : index
    %c0_427 = arith.constant 0 : index
    %c0_428 = arith.constant 0 : index
    %440 = vector.load %arg1[%c17_426, %c0_427, %c0_428] : memref<21x8x128xf32, #tpu.memory_space<vmem>>, vector<1x8x128xf32>
    %441 = vector.shape_cast %440 : vector<1x8x128xf32> to vector<8x128xf32>
    %442 = arith.mulf %439, %441 : vector<8x128xf32>
    %443 = arith.addf %437, %442 : vector<8x128xf32>
    %c18_429 = arith.constant 18 : index
    %c0_430 = arith.constant 0 : index
    %c0_431 = arith.constant 0 : index
    %444 = vector.load %arg1[%c18_429, %c0_430, %c0_431] : memref<21x8x128xf32, #tpu.memory_space<vmem>>, vector<1x8x128xf32>
    %445 = vector.shape_cast %444 : vector<1x8x128xf32> to vector<8x128xf32>
    %c18_432 = arith.constant 18 : index
    %c0_433 = arith.constant 0 : index
    %c0_434 = arith.constant 0 : index
    %446 = vector.load %arg1[%c18_432, %c0_433, %c0_434] : memref<21x8x128xf32, #tpu.memory_space<vmem>>, vector<1x8x128xf32>
    %447 = vector.shape_cast %446 : vector<1x8x128xf32> to vector<8x128xf32>
    %448 = arith.mulf %445, %447 : vector<8x128xf32>
    %449 = arith.addf %443, %448 : vector<8x128xf32>
    %c19_435 = arith.constant 19 : index
    %c0_436 = arith.constant 0 : index
    %c0_437 = arith.constant 0 : index
    %450 = vector.load %arg1[%c19_435, %c0_436, %c0_437] : memref<21x8x128xf32, #tpu.memory_space<vmem>>, vector<1x8x128xf32>
    %451 = vector.shape_cast %450 : vector<1x8x128xf32> to vector<8x128xf32>
    %c19_438 = arith.constant 19 : index
    %c0_439 = arith.constant 0 : index
    %c0_440 = arith.constant 0 : index
    %452 = vector.load %arg1[%c19_438, %c0_439, %c0_440] : memref<21x8x128xf32, #tpu.memory_space<vmem>>, vector<1x8x128xf32>
    %453 = vector.shape_cast %452 : vector<1x8x128xf32> to vector<8x128xf32>
    %454 = arith.mulf %451, %453 : vector<8x128xf32>
    %455 = arith.addf %449, %454 : vector<8x128xf32>
    %c5_441 = arith.constant 5 : index
    %c0_442 = arith.constant 0 : index
    %c0_443 = arith.constant 0 : index
    %456 = vector.load %arg3[%c5_441, %c0_442, %c0_443] : memref<6x8x128xf32, #tpu.memory_space<vmem>>, vector<1x8x128xf32>
    %457 = vector.shape_cast %456 : vector<1x8x128xf32> to vector<8x128xf32>
    %c5_444 = arith.constant 5 : index
    %c0_445 = arith.constant 0 : index
    %c0_446 = arith.constant 0 : index
    %458 = vector.load %arg3[%c5_444, %c0_445, %c0_446] : memref<6x8x128xf32, #tpu.memory_space<vmem>>, vector<1x8x128xf32>
    %459 = vector.shape_cast %458 : vector<1x8x128xf32> to vector<8x128xf32>
    %460 = arith.mulf %457, %459 : vector<8x128xf32>
    %461 = arith.addf %455, %460 : vector<8x128xf32>
    %c35 = arith.constant 35 : index
    %c0_447 = arith.constant 0 : index
    %c0_448 = arith.constant 0 : index
    %462 = vector.load %arg2[%c35, %c0_447, %c0_448] : memref<36x8x128xf32, #tpu.memory_space<vmem>>, vector<1x8x128xf32>
    %463 = vector.shape_cast %462 : vector<1x8x128xf32> to vector<8x128xf32>
    %464 = vector.shape_cast %461 : vector<8x128xf32> to vector<1x8x128xf32>
    tpu.vector_store %arg2[%c35, %c0_447, %c0_448], %464 {strides = array<i32>} : memref<36x8x128xf32, #tpu.memory_space<vmem>>, vector<1x8x128xf32>,
    return
  }
  func.func @transform_0(%arg0: i32) -> (i32, i32, i32) {
    %c0_i32 = arith.constant 0 : i32
    %c0_i32_0 = arith.constant 0 : i32
    %c0_i32_1 = arith.constant 0 : i32
    return %c0_i32, %arg0, %c0_i32_0 : i32, i32, i32
  }
  func.func @transform_1(%arg0: i32) -> (i32, i32, i32) {
    %c0_i32 = arith.constant 0 : i32
    %c0_i32_0 = arith.constant 0 : i32
    %c0_i32_1 = arith.constant 0 : i32
    return %c0_i32, %arg0, %c0_i32_0 : i32, i32, i32
  }
}

</mosaic_0001>

<llo_original>
// kernel: cholesky_forward.1
$region0: #{cholesky_forward.1}
  #allocation0 [shape = 'u32[]', space=smem, size = 0x4, offset = 0x4, fixed_abs, tag = 'smem constant byte address 0x4 - core index']
  #allocation1 [shape = 'u32[144,128]{1,0:T(1,128)}', space=vmem, size = 0x12000, scoped, tag = 'internal scratch']
  #allocation2 [shape = 'f32[6,8,128]{2,1,0:T(8,128)}', space=vmem, size = 0x6000, scoped, tag = 'scratch operand']
  %s0 = inlined_call_operand.vmem [shape: f32[21,8,128], index: 0, kind: input, shape index: {}]
  %s1 = inlined_call_operand.vmem [shape: f32[36,8,128], index: 1, kind: output, shape index: {}]
  %s2 = sld [smem:[#allocation0]]
  $region14: #{cholesky_forward.1} parent=0
    _
  %s4 = ssub.s32 1, %s2
  %s5 = scalar_select 0, %s4, %s2
  // Predicated region
  $region2: #{cholesky_forward.1} parent=0 // pred_check
    _
  $region3: #{cholesky_forward.1} parent=0 // pred_check_branch
    %7 = sbr.rel (0) target = $region5
  $region4: #{cholesky_forward.1} parent=0 // pred_region
    _
  $region5: #{cholesky_forward.1} parent=0 // pred_fallthru
    _
  %v8 = vld [vmem:[%s0] sm:$0xff]
  %v9 = vadd.f32 %v8, 1e-08
  %10 = vst [vmem:[#allocation2] sm:$0xff] %v9
  %s11 = scalar_lea.vmem %s0, 16
  %v12 = vld [vmem:[%s11] sm:$0xff]
  %v13 = vadd.f32 %v12, 1e-08
  %s14 = scalar_lea.vmem [#allocation2], 8
  %15 = vst [vmem:[%s14] sm:$0xff] %v13
  %s16 = scalar_lea.vmem %s0, 40
  %v17 = vld [vmem:[%s16] sm:$0xff]
  %v18 = vadd.f32 %v17, 1e-08
  %s19 = scalar_lea.vmem [#allocation2], 16
  %20 = vst [vmem:[%s19] sm:$0xff] %v18
  %s21 = scalar_lea.vmem %s0, 72
  %v22 = vld [vmem:[%s21] sm:$0xff]
  %v23 = vadd.f32 %v22, 1e-08
  %s24 = scalar_lea.vmem [#allocation2], 24
  %25 = vst [vmem:[%s24] sm:$0xff] %v23
  %s26 = scalar_lea.vmem %s0, 112
  %v27 = vld [vmem:[%s26] sm:$0xff]
  %v28 = vadd.f32 %v27, 1e-08
  %s29 = scalar_lea.vmem [#allocation2], 32
  %30 = vst [vmem:[%s29] sm:$0xff] %v28
  %s31 = scalar_lea.vmem %s0, 160
  %v32 = vld [vmem:[%s31] sm:$0xff]
  %v33 = vadd.f32 %v32, 1e-08
  %s34 = scalar_lea.vmem [#allocation2], 40
  %35 = vst [vmem:[%s34] sm:$0xff] %v33
  %v36 = vld [vmem:[#allocation2] sm:$0xff]
  %v37 = vmul.f32 %v36, %v36
  %38 = vst [vmem:[%s1] sm:$0xff] %v37
  %v39 = vld [vmem:[#allocation2] sm:$0xff]
  %s40 = scalar_lea.vmem %s0, 8
  %v41 = vld [vmem:[%s40] sm:$0xff]
  %v42 = vmul.f32 %v39, %v41
  %s43 = scalar_lea.vmem %s1, 8
  %44 = vst [vmem:[%s43] sm:$0xff] %v42
  %s45 = scalar_lea.vmem %s1, 48
  %46 = vst [vmem:[%s45] sm:$0xff] %v42
  %v47 = vld [vmem:[#allocation2] sm:$0xff]
  %s48 = scalar_lea.vmem %s0, 24
  %v49 = vld [vmem:[%s48] sm:$0xff]
  %v50 = vmul.f32 %v47, %v49
  %s51 = scalar_lea.vmem %s1, 16
  %52 = vst [vmem:[%s51] sm:$0xff] %v50
  %s53 = scalar_lea.vmem %s1, 96
  %54 = vst [vmem:[%s53] sm:$0xff] %v50
  %v55 = vld [vmem:[#allocation2] sm:$0xff]
  %s56 = scalar_lea.vmem %s0, 48
  %v57 = vld [vmem:[%s56] sm:$0xff]
  %v58 = vmul.f32 %v55, %v57
  %s59 = scalar_lea.vmem %s1, 24
  %60 = vst [vmem:[%s59] sm:$0xff] %v58
  %s61 = scalar_lea.vmem %s1, 144
  %62 = vst [vmem:[%s61] sm:$0xff] %v58
  %v63 = vld [vmem:[#allocation2] sm:$0xff]
  %s64 = scalar_lea.vmem %s0, 80
  %v65 = vld [vmem:[%s64] sm:$0xff]
  %v66 = vmul.f32 %v63, %v65
  %s67 = scalar_lea.vmem %s1, 32
  %68 = vst [vmem:[%s67] sm:$0xff] %v66
  %s69 = scalar_lea.vmem %s1, 192
  %70 = vst [vmem:[%s69] sm:$0xff] %v66
  %v71 = vld [vmem:[#allocation2] sm:$0xff]
  %s72 = scalar_lea.vmem %s0, 120
  %v73 = vld [vmem:[%s72] sm:$0xff]
  %v74 = vmul.f32 %v71, %v73
  %s75 = scalar_lea.vmem %s1, 40
  %76 = vst [vmem:[%s75] sm:$0xff] %v74
  %s77 = scalar_lea.vmem %s1, 240
  %78 = vst [vmem:[%s77] sm:$0xff] %v74
  %v79 = vld [vmem:[%s40] sm:$0xff]
  %v80 = vmul.f32 %v79, %v79
  %v81 = vld [vmem:[%s14] sm:$0xff]
  %v82 = vmul.f32 %v81, %v81
  %v83 = vadd.f32 %v80, %v82
  %s84 = scalar_lea.vmem %s1, 56
  %85 = vst [vmem:[%s84] sm:$0xff] %v83
  %v86 = vld [vmem:[%s40] sm:$0xff]
  %v87 = vld [vmem:[%s48] sm:$0xff]
  %v88 = vmul.f32 %v86, %v87
  %v89 = vld [vmem:[%s14] sm:$0xff]
  %s90 = scalar_lea.vmem %s0, 32
  %v91 = vld [vmem:[%s90] sm:$0xff]
  %v92 = vmul.f32 %v89, %v91
  %v93 = vadd.f32 %v88, %v92
  %s94 = scalar_lea.vmem %s1, 64
  %95 = vst [vmem:[%s94] sm:$0xff] %v93
  %s96 = scalar_lea.vmem %s1, 104
  %97 = vst [vmem:[%s96] sm:$0xff] %v93
  %v98 = vld [vmem:[%s40] sm:$0xff]
  %v99 = vld [vmem:[%s56] sm:$0xff]
  %v100 = vmul.f32 %v98, %v99
  %v101 = vld [vmem:[%s14] sm:$0xff]
  %s102 = scalar_lea.vmem %s0, 56
  %v103 = vld [vmem:[%s102] sm:$0xff]
  %v104 = vmul.f32 %v101, %v103
  %v105 = vadd.f32 %v100, %v104
  %s106 = scalar_lea.vmem %s1, 72
  %107 = vst [vmem:[%s106] sm:$0xff] %v105
  %s108 = scalar_lea.vmem %s1, 152
  %109 = vst [vmem:[%s108] sm:$0xff] %v105
  %v110 = vld [vmem:[%s40] sm:$0xff]
  %v111 = vld [vmem:[%s64] sm:$0xff]
  %v112 = vmul.f32 %v110, %v111
  %v113 = vld [vmem:[%s14] sm:$0xff]
  %s114 = scalar_lea.vmem %s0, 88
  %v115 = vld [vmem:[%s114] sm:$0xff]
  %v116 = vmul.f32 %v113, %v115
  %v117 = vadd.f32 %v112, %v116
  %s118 = scalar_lea.vmem %s1, 80
  %119 = vst [vmem:[%s118] sm:$0xff] %v117
  %s120 = scalar_lea.vmem %s1, 200
  %121 = vst [vmem:[%s120] sm:$0xff] %v117
  %v122 = vld [vmem:[%s40] sm:$0xff]
  %v123 = vld [vmem:[%s72] sm:$0xff]
  %v124 = vmul.f32 %v122, %v123
  %v125 = vld [vmem:[%s14] sm:$0xff]
  %s126 = scalar_lea.vmem %s0, 128
  %v127 = vld [vmem:[%s126] sm:$0xff]
  %v128 = vmul.f32 %v125, %v127
  %v129 = vadd.f32 %v124, %v128
  %s130 = scalar_lea.vmem %s1, 88
  %131 = vst [vmem:[%s130] sm:$0xff] %v129
  %s132 = scalar_lea.vmem %s1, 248
  %133 = vst [vmem:[%s132] sm:$0xff] %v129
  %v134 = vld [vmem:[%s48] sm:$0xff]
  %v135 = vmul.f32 %v134, %v134
  %v136 = vld [vmem:[%s90] sm:$0xff]
  %v137 = vmul.f32 %v136, %v136
  %v138 = vadd.f32 %v135, %v137
  %v139 = vld [vmem:[%s19] sm:$0xff]
  %v140 = vmul.f32 %v139, %v139
  %v141 = vadd.f32 %v138, %v140
  %s142 = scalar_lea.vmem %s1, 112
  %143 = vst [vmem:[%s142] sm:$0xff] %v141
  %v144 = vld [vmem:[%s48] sm:$0xff]
  %v145 = vld [vmem:[%s56] sm:$0xff]
  %v146 = vmul.f32 %v144, %v145
  %v147 = vld [vmem:[%s90] sm:$0xff]
  %v148 = vld [vmem:[%s102] sm:$0xff]
  %v149 = vmul.f32 %v147, %v148
  %v150 = vadd.f32 %v146, %v149
  %v151 = vld [vmem:[%s19] sm:$0xff]
  %s152 = scalar_lea.vmem %s0, 64
  %v153 = vld [vmem:[%s152] sm:$0xff]
  %v154 = vmul.f32 %v151, %v153
  %v155 = vadd.f32 %v150, %v154
  %s156 = scalar_lea.vmem %s1, 120
  %157 = vst [vmem:[%s156] sm:$0xff] %v155
  %s158 = scalar_lea.vmem %s1, 160
  %159 = vst [vmem:[%s158] sm:$0xff] %v155
  %v160 = vld [vmem:[%s48] sm:$0xff]
  %v161 = vld [vmem:[%s64] sm:$0xff]
  %v162 = vmul.f32 %v160, %v161
  %v163 = vld [vmem:[%s90] sm:$0xff]
  %v164 = vld [vmem:[%s114] sm:$0xff]
  %v165 = vmul.f32 %v163, %v164
  %v166 = vadd.f32 %v162, %v165
  %v167 = vld [vmem:[%s19] sm:$0xff]
  %s168 = scalar_lea.vmem %s0, 96
  %v169 = vld [vmem:[%s168] sm:$0xff]
  %v170 = vmul.f32 %v167, %v169
  %v171 = vadd.f32 %v166, %v170
  %s172 = scalar_lea.vmem %s1, 128
  %173 = vst [vmem:[%s172] sm:$0xff] %v171
  %s174 = scalar_lea.vmem %s1, 208
  %175 = vst [vmem:[%s174] sm:$0xff] %v171
  %v176 = vld [vmem:[%s48] sm:$0xff]
  %v177 = vld [vmem:[%s72] sm:$0xff]
  %v178 = vmul.f32 %v176, %v177
  %v179 = vld [vmem:[%s90] sm:$0xff]
  %v180 = vld [vmem:[%s126] sm:$0xff]
  %v181 = vmul.f32 %v179, %v180
  %v182 = vadd.f32 %v178, %v181
  %v183 = vld [vmem:[%s19] sm:$0xff]
  %s184 = scalar_lea.vmem %s0, 136
  %v185 = vld [vmem:[%s184] sm:$0xff]
  %v186 = vmul.f32 %v183, %v185
  %v187 = vadd.f32 %v182, %v186
  %s188 = scalar_lea.vmem %s1, 136
  %189 = vst [vmem:[%s188] sm:$0xff] %v187
  %s190 = scalar_lea.vmem %s1, 256
  %191 = vst [vmem:[%s190] sm:$0xff] %v187
  %v192 = vld [vmem:[%s56] sm:$0xff]
  %v193 = vmul.f32 %v192, %v192
  %v194 = vld [vmem:[%s102] sm:$0xff]
  %v195 = vmul.f32 %v194, %v194
  %v196 = vadd.f32 %v193, %v195
  %v197 = vld [vmem:[%s152] sm:$0xff]
  %v198 = vmul.f32 %v197, %v197
  %v199 = vadd.f32 %v196, %v198
  %v200 = vld [vmem:[%s24] sm:$0xff]
  %v201 = vmul.f32 %v200, %v200
  %v202 = vadd.f32 %v199, %v201
  %s203 = scalar_lea.vmem %s1, 168
  %204 = vst [vmem:[%s203] sm:$0xff] %v202
  %v205 = vld [vmem:[%s56] sm:$0xff]
  %v206 = vld [vmem:[%s64] sm:$0xff]
  %v207 = vmul.f32 %v205, %v206
  %v208 = vld [vmem:[%s102] sm:$0xff]
  %v209 = vld [vmem:[%s114] sm:$0xff]
  %v210 = vmul.f32 %v208, %v209
  %v211 = vadd.f32 %v207, %v210
  %v212 = vld [vmem:[%s152] sm:$0xff]
  %v213 = vld [vmem:[%s168] sm:$0xff]
  %v214 = vmul.f32 %v212, %v213
  %v215 = vadd.f32 %v211, %v214
  %v216 = vld [vmem:[%s24] sm:$0xff]
  %s217 = scalar_lea.vmem %s0, 104
  %v218 = vld [vmem:[%s217] sm:$0xff]
  %v219 = vmul.f32 %v216, %v218
  %v220 = vadd.f32 %v215, %v219
  %s221 = scalar_lea.vmem %s1, 176
  %222 = vst [vmem:[%s221] sm:$0xff] %v220
  %s223 = scalar_lea.vmem %s1, 216
  %224 = vst [vmem:[%s223] sm:$0xff] %v220
  %v225 = vld [vmem:[%s56] sm:$0xff]
  %v226 = vld [vmem:[%s72] sm:$0xff]
  %v227 = vmul.f32 %v225, %v226
  %v228 = vld [vmem:[%s102] sm:$0xff]
  %v229 = vld [vmem:[%s126] sm:$0xff]
  %v230 = vmul.f32 %v228, %v229
  %v231 = vadd.f32 %v227, %v230
  %v232 = vld [vmem:[%s152] sm:$0xff]
  %v233 = vld [vmem:[%s184] sm:$0xff]
  %v234 = vmul.f32 %v232, %v233
  %v235 = vadd.f32 %v231, %v234
  %v236 = vld [vmem:[%s24] sm:$0xff]
  %s237 = scalar_lea.vmem %s0, 144
  %v238 = vld [vmem:[%s237] sm:$0xff]
  %v239 = vmul.f32 %v236, %v238
  %v240 = vadd.f32 %v235, %v239
  %s241 = scalar_lea.vmem %s1, 184
  %242 = vst [vmem:[%s241] sm:$0xff] %v240
  %s243 = scalar_lea.vmem %s1, 264
  %244 = vst [vmem:[%s243] sm:$0xff] %v240
  %v245 = vld [vmem:[%s64] sm:$0xff]
  %v246 = vmul.f32 %v245, %v245
  %v247 = vld [vmem:[%s114] sm:$0xff]
  %v248 = vmul.f32 %v247, %v247
  %v249 = vadd.f32 %v246, %v248
  %v250 = vld [vmem:[%s168] sm:$0xff]
  %v251 = vmul.f32 %v250, %v250
  %v252 = vadd.f32 %v249, %v251
  %v253 = vld [vmem:[%s217] sm:$0xff]
  %v254 = vmul.f32 %v253, %v253
  %v255 = vadd.f32 %v252, %v254
  %v256 = vld [vmem:[%s29] sm:$0xff]
  %v257 = vmul.f32 %v256, %v256
  %v258 = vadd.f32 %v255, %v257
  %s259 = scalar_lea.vmem %s1, 224
  %260 = vst [vmem:[%s259] sm:$0xff] %v258
  %v261 = vld [vmem:[%s64] sm:$0xff]
  %v262 = vld [vmem:[%s72] sm:$0xff]
  %v263 = vmul.f32 %v261, %v262
  %v264 = vld [vmem:[%s114] sm:$0xff]
  %v265 = vld [vmem:[%s126] sm:$0xff]
  %v266 = vmul.f32 %v264, %v265
  %v267 = vadd.f32 %v263, %v266
  %v268 = vld [vmem:[%s168] sm:$0xff]
  %v269 = vld [vmem:[%s184] sm:$0xff]
  %v270 = vmul.f32 %v268, %v269
  %v271 = vadd.f32 %v267, %v270
  %v272 = vld [vmem:[%s217] sm:$0xff]
  %v273 = vld [vmem:[%s237] sm:$0xff]
  %v274 = vmul.f32 %v272, %v273
  %v275 = vadd.f32 %v271, %v274
  %v276 = vld [vmem:[%s29] sm:$0xff]
  %s277 = scalar_lea.vmem %s0, 152
  %v278 = vld [vmem:[%s277] sm:$0xff]
  %v279 = vmul.f32 %v276, %v278
  %v280 = vadd.f32 %v275, %v279
  %s281 = scalar_lea.vmem %s1, 232
  %282 = vst [vmem:[%s281] sm:$0xff] %v280
  %s283 = scalar_lea.vmem %s1, 272
  %284 = vst [vmem:[%s283] sm:$0xff] %v280
  %v285 = vld [vmem:[%s72] sm:$0xff]
  %v286 = vmul.f32 %v285, %v285
  %v287 = vld [vmem:[%s126] sm:$0xff]
  %v288 = vmul.f32 %v287, %v287
  %v289 = vadd.f32 %v286, %v288
  %v290 = vld [vmem:[%s184] sm:$0xff]
  %v291 = vmul.f32 %v290, %v290
  %v292 = vadd.f32 %v289, %v291
  %v293 = vld [vmem:[%s237] sm:$0xff]
  %v294 = vmul.f32 %v293, %v293
  %v295 = vadd.f32 %v292, %v294
  %v296 = vld [vmem:[%s277] sm:$0xff]
  %v297 = vmul.f32 %v296, %v296
  %v298 = vadd.f32 %v295, %v297
  %v299 = vld [vmem:[%s34] sm:$0xff]
  %v300 = vmul.f32 %v299, %v299
  %v301 = vadd.f32 %v298, %v300
  %s302 = scalar_lea.vmem %s1, 280
  %303 = vst [vmem:[%s302] sm:$0xff] %v301
  // Predicated region
  $region6: #{cholesky_forward.1} parent=0 // pred_check
    _
  $region7: #{cholesky_forward.1} parent=0 // pred_check_branch
    %305 = sbr.rel (0) target = $region9
  $region8: #{cholesky_forward.1} parent=0 // pred_region
    _
  $region9: #{cholesky_forward.1} parent=0 // pred_fallthru
    _
  // Predicated region
  $region10: #{cholesky_forward.1} parent=0 // pred_check
    _
  $region11: #{cholesky_forward.1} parent=0 // pred_check_branch
    %307 = sbr.rel (0) target = $region13
  $region12: #{cholesky_forward.1} parent=0 // pred_region
    _
  $region13: #{cholesky_forward.1} parent=0 // pred_fallthru
    _

</llo_original>
